<compile_context>
chip_gen: v6e
topology: v6e:2x2x1
jax: 0.10.0
libtpu: 0.0.40
codegen_flags: <defaults>
</compile_context>

<pallas_src>
import functools

import jax
import jax.numpy as jnp
from jax.experimental import pallas as pl
from jax.experimental.pallas import tpu as pltpu


# Finite "masked out" bias: exp() underflows to exactly 0 and avoids -inf NaN traps.
# NOTE: a row that is fully masked by an explicit user mask is undefined behaviour in the
# reference (softmax of all -inf); here it degrades to a uniform average instead of NaN.
_MASK_VALUE = -1e30


def _attention_kernel(*refs, heads, causal, has_bias, q_block, kv_block, compute_dtype):
    if has_bias:
        (x_ref, xt_ref, wq_ref, wk_ref, wv_ref, wo_ref, bo_ref, mask_ref,
         o_ref, k_scr, v_scr) = refs
    else:
        (x_ref, xt_ref, wq_ref, wk_ref, wv_ref, wo_ref, bo_ref,
         o_ref, k_scr, v_scr) = refs
        mask_ref = None

    qi = pl.program_id(1)
    n, d = x_ref.shape
    tq, tk = q_block, kv_block
    dh = d // heads
    n_kv = n // tk
    cdt = compute_dtype

    # ---- K / V projection: once per batch element, into (kv-block, head)-major scratch.
    #      K^T is produced directly as Wk @ x^T (pure MXU, paid once per batch element).
    @pl.when(qi == 0)
    def _():
        kt = jnp.dot(wk_ref[...], xt_ref[...], preferred_element_type=jnp.float32)   # (d, n)
        vf = jnp.dot(x_ref[...], wv_ref[...], preferred_element_type=jnp.float32)    # (n, d)
        for jb in range(n_kv):
            for h in range(heads):
                k_scr[jb, h] = kt[h * dh:(h + 1) * dh, jb * tk:(jb + 1) * tk].astype(cdt)
                v_scr[jb, h] = vf[jb * tk:(jb + 1) * tk, h * dh:(h + 1) * dh].astype(cdt)

    # ---- Q for this q-block (dim**-0.5 already folded into Wq on the host).
    row0 = pl.multiple_of(qi * tq, tq)
    xq = x_ref[pl.ds(row0, tq), :]
    q_full = jnp.dot(xq, wq_ref[...], preferred_element_type=jnp.float32)             # (tq, d)

    # Causal path: skip KV blocks that lie entirely above the diagonal.
    if causal:
        num_blocks = pl.cdiv((qi + 1) * tq, tk)
        row_ids = qi * tq + jax.lax.broadcasted_iota(jnp.int32, (tq, tk), 0)
    else:
        num_blocks = n_kv

    head_outs = []
    for h in range(heads):
        q_h = q_full[:, h * dh:(h + 1) * dh].astype(cdt)                              # (tq, dh)

        def body(j, carry, h=h, q_h=q_h):
            m_prev, l_prev, acc_prev = carry
            # Scores: plain (tq, dh) @ (dh, tk) matmul, lane-dense tk output.
            s = jnp.dot(q_h, k_scr[j, h], preferred_element_type=jnp.float32)         # (tq, tk)
            if causal:
                col_ids = j * tk + jax.lax.broadcasted_iota(jnp.int32, (tq, tk), 1)
                s = jnp.where(row_ids >= col_ids, s, _MASK_VALUE)
            if has_bias:
                s = jnp.where(mask_ref[j] != 0, s, _MASK_VALUE)
            # Online (flash) softmax update, all in f32.
            m_new = jnp.maximum(m_prev, jnp.max(s, axis=-1, keepdims=True))
            alpha = jnp.exp(m_prev - m_new)
            p = jnp.exp(s - m_new)
            l_new = alpha * l_prev + jnp.sum(p, axis=-1, keepdims=True)
            pv = jnp.dot(p.astype(cdt), v_scr[j, h], preferred_element_type=jnp.float32)
            acc_new = alpha * acc_prev + pv
            return m_new, l_new, acc_new

        m0 = jnp.full((tq, 1), _MASK_VALUE, jnp.float32)
        l0 = jnp.zeros((tq, 1), jnp.float32)
        a0 = jnp.zeros((tq, dh), jnp.float32)
        _, l_f, acc_f = jax.lax.fori_loop(0, num_blocks, body, (m0, l0, a0))

        inv_l = pl.reciprocal(l_f, approx=True)
        head_outs.append((acc_f * inv_l).astype(cdt))

    # One full-depth output projection instead of a per-head Wo loop.
    out_cat = jnp.concatenate(head_outs, axis=-1)                                      # (tq, d)
    out = jnp.dot(out_cat, wo_ref[...], preferred_element_type=jnp.float32) + bo_ref[...]
    o_ref[...] = out.astype(o_ref.dtype)


def _pick_block(n):
    for t in (512, 256, 128):
        if n % t == 0:
            return t
    return n


def _vmem_limit_bytes():
    """~3/4 of the chip's physical VMEM (≈96 MiB on v5e/v6e, ≈48 MiB on v7x)."""
    try:
        info = pltpu.get_tpu_info()
        for name in ("vmem_capacity_bytes", "vmem_size_bytes", "vmem_bytes"):
            cap = getattr(info, name, None)
            if cap:
                return max(32 * 1024 * 1024, min(int(cap) * 3 // 4, 112 * 1024 * 1024))
    except Exception:
        pass
    return 64 * 1024 * 1024


def causal_attention_pallas(x, params, heads, mask=None, causal=False,
                            use_bf16=True, q_block=None, kv_block=None):
    b, n, d = x.shape
    assert d % heads == 0, "dim must be divisible by heads"
    scale = float(d) ** (-0.5)             # NOTE: module scales by dim**-0.5 (full dim)
    dh = d // heads

    w_dtype = jnp.bfloat16 if use_bf16 else jnp.float32

    # PyTorch Linear convention: W is (out, in).  Score scale folded into Wq.
    wq_t = (params["wq"].T * scale).astype(w_dtype)          # (D, D): q = x @ wq_t
    wk = params["wkv"][:d].astype(w_dtype)                   # (D, D): K^T = wk @ x^T
    wv_t = params["wkv"][d:].T.astype(w_dtype)               # (D, D): V = x @ wv_t
    wo_t = params["wo"].T.astype(w_dtype)                    # (D, D)
    bo = params["bo"].reshape(1, d).astype(jnp.float32)      # (1, D)

    tq = min(q_block if q_block is not None else _pick_block(n), n)
    tk = min(kv_block if kv_block is not None else _pick_block(n), n)
    assert n % tq == 0 and n % tk == 0, "sequence length must be divisible by the blocks"
    n_q, n_kv = n // tq, n // tk

    x_in = x.astype(w_dtype)                                  # halves x DMA on the bf16 path
    x_t = jnp.swapaxes(x_in, 1, 2)                            # (B, D, N): feeds K^T matmul

    in_specs = [
        pl.BlockSpec((pl.Squeezed(), n, d), lambda bi, qi: (bi, 0, 0)),   # x (full seq)
        pl.BlockSpec((pl.Squeezed(), d, n), lambda bi, qi: (bi, 0, 0)),   # x^T (full seq)
        pl.BlockSpec((d, d), lambda bi, qi: (0, 0)),                      # Wq^T * scale
        pl.BlockSpec((d, d), lambda bi, qi: (0, 0)),                      # Wk
        pl.BlockSpec((d, d), lambda bi, qi: (0, 0)),                      # Wv^T
        pl.BlockSpec((d, d), lambda bi, qi: (0, 0)),                      # Wo^T
        pl.BlockSpec((1, d), lambda bi, qi: (0, 0)),                      # bo
    ]
    args = [x_in, x_t, wq_t, wk, wv_t, wo_t, bo]

    has_bias = mask is not None
    if has_bias:
        # Raw 0/1 mask as int8, laid out as (q_block, kv_block, tq, tk) so the kernel only
        # ever indexes leading (untiled) dims of the block.
        m8 = (mask != 0).astype(jnp.int8)
        m8 = m8.reshape(n_q, tq, n_kv, tk).transpose(0, 2, 1, 3)          # (n_q, n_kv, tq, tk)
        in_specs.append(pl.BlockSpec((pl.Squeezed(), n_kv, tq, tk),
                                     lambda bi, qi: (qi, 0, 0, 0)))
        args.append(m8)

    kernel = functools.partial(_attention_kernel, heads=heads, causal=causal,
                               has_bias=has_bias, q_block=tq, kv_block=tk,
                               compute_dtype=w_dtype)

    return pl.pallas_call(
        kernel,
        out_shape=jax.ShapeDtypeStruct((b, n, d), x.dtype),
        grid_spec=pltpu.PrefetchScalarGridSpec(
            num_scalar_prefetch=0,
            grid=(b, n_q),
            in_specs=in_specs,
            out_specs=pl.BlockSpec((pl.Squeezed(), tq, d), lambda bi, qi: (bi, qi, 0)),
            scratch_shapes=[
                pltpu.VMEM((n_kv, heads, dh, tk), w_dtype),   # K^T, (kv-block, head)-major
                pltpu.VMEM((n_kv, heads, tk, dh), w_dtype),   # V,   (kv-block, head)-major
            ],
        ),
        compiler_params=pltpu.CompilerParams(
            dimension_semantics=("parallel", "arbitrary"),
            vmem_limit_bytes=_vmem_limit_bytes(),
        ),
    )(*args)


def causal_attention_ref(x, params, heads, mask=None):
    """Pure-JAX reference mirroring the PyTorch forward exactly."""
    b, n, d = x.shape
    dh = d // heads
    scale = float(d) ** (-0.5)
    q = x @ params["wq"].T
    kv = x @ params["wkv"].T
    k, v = kv[..., :d], kv[..., d:]
    q = q.reshape(b, n, heads, dh).transpose(0, 2, 1, 3)
    k = k.reshape(b, n, heads, dh).transpose(0, 2, 1, 3)
    v = v.reshape(b, n, heads, dh).transpose(0, 2, 1, 3)
    dots = jnp.einsum("bhqd,bhkd->bhqk", q, k) * scale
    if mask is not None:
        dots = jnp.where(mask[None, None] == 0, -jnp.inf, dots)
    attn = jax.nn.softmax(dots, axis=-1)
    out = jnp.einsum("bhqk,bhkd->bhqd", attn, v)
    out = out.transpose(0, 2, 1, 3).reshape(b, n, d)
    return out @ params["wo"].T + params["bo"]


def init_params(key, dim):
    """Deterministic synthetic weights, PyTorch Linear conventions: W is (out, in)."""
    k1, k2, k3, k4 = jax.random.split(key, 4)
    s = 1.0 / (dim ** 0.5)
    return {
        "wq": jax.random.normal(k1, (dim, dim), jnp.float32) * s,
        "wkv": jax.random.normal(k2, (2 * dim, dim), jnp.float32) * s,
        "wo": jax.random.normal(k3, (dim, dim), jnp.float32) * s,
        "bo": jax.random.normal(k4, (dim,), jnp.float32) * s,
    }


if __name__ == "__main__":
    B, N, DIM, HEADS = 2, 8, 32, 4

    key = jax.random.PRNGKey(0)
    kx, kp, km = jax.random.split(key, 3)
    x = jax.random.normal(kx, (B, N, DIM), jnp.float32)
    params = init_params(kp, DIM)

    # Case 1: mask=None, exact (f32) operand path.
    out = jax.block_until_ready(causal_attention_pallas(x, params, HEADS, use_bf16=False))
    ref = causal_attention_ref(x, params, HEADS)
    assert jnp.allclose(out, ref, atol=5e-3, rtol=5e-3), "mask=None mismatch"

    # Case 2: in-kernel causal mask; KV blocks above the diagonal are skipped.
    tril = jnp.tril(jnp.ones((N, N), jnp.int32))
    out_c = jax.block_until_ready(
        causal_attention_pallas(x, params, HEADS, causal=True, use_bf16=False))
    ref_c = causal_attention_ref(x, params, HEADS, mask=tril)
    assert jnp.allclose(out_c, ref_c, atol=5e-3, rtol=5e-3), "causal (iota) mismatch"

    # Case 3: arbitrary explicit mask (int8 DMA + in-kernel additive masking);
    #         every row keeps >= 1 entry so the softmax is well defined.
    rnd = (jax.random.uniform(km, (N, N)) > 0.4).astype(jnp.int32)
    rnd = rnd.at[jnp.arange(N), jnp.arange(N)].set(1)
    out_m = jax.block_until_ready(
        causal_attention_pallas(x, params, HEADS, mask=rnd, use_bf16=False))
    ref_m = causal_attention_ref(x, params, HEADS, mask=rnd)
    assert jnp.allclose(out_m, ref_m, atol=5e-3, rtol=5e-3), "explicit mask mismatch"

    # Case 4: default bf16 MXU operands (f32 accumulation + f32 softmax), loose tolerance.
    out_b = jax.block_until_ready(
        causal_attention_pallas(x, params, HEADS, causal=True))
    assert jnp.allclose(out_b.astype(jnp.float32), ref_c, atol=1e-1, rtol=1e-1), \
        "bf16 MXU path mismatch"

    print("KERNEL_OK")
</pallas_src>

<mosaic_0001>
module attributes {stable_mosaic.version = 11 : i64} {
  func.func @_attention_kernel(%arg0: i32, %arg1: i32, %arg2: memref<1x8x32xf32, #tpu.memory_space<vmem>>, %arg3: memref<1x32x8xf32, #tpu.memory_space<vmem>>, %arg4: memref<32x32xf32, #tpu.memory_space<vmem>>, %arg5: memref<32x32xf32, #tpu.memory_space<vmem>>, %arg6: memref<32x32xf32, #tpu.memory_space<vmem>>, %arg7: memref<32x32xf32, #tpu.memory_space<vmem>>, %arg8: memref<1x32xf32, #tpu.memory_space<vmem>>, %arg9: memref<1x8x32xf32, #tpu.memory_space<vmem>>, %arg10: memref<1x4x8x8xf32, #tpu.memory_space<vmem>>, %arg11: memref<1x4x8x8xf32, #tpu.memory_space<vmem>>) attributes {dimension_semantics = [#tpu.dimension_semantics<parallel>, #tpu.dimension_semantics<arbitrary>], iteration_bounds = array<i64: 2, 1>, scalar_prefetch = 0 : i64, scratch_operands = 2 : i64, tpu.core_type = #tpu.core_type<tc>, window_params = [{transform_indices = @transform_0, window_bounds = array<i64: 1, 8, 32>}, {transform_indices = @transform_1, window_bounds = array<i64: 1, 32, 8>}, {pipeline_mode = #tpu.pipeline_mode<synchronous>, transform_indices = @transform_2, window_bounds = array<i64: 32, 32>}, {pipeline_mode = #tpu.pipeline_mode<synchronous>, transform_indices = @transform_3, window_bounds = array<i64: 32, 32>}, {pipeline_mode = #tpu.pipeline_mode<synchronous>, transform_indices = @transform_4, window_bounds = array<i64: 32, 32>}, {pipeline_mode = #tpu.pipeline_mode<synchronous>, transform_indices = @transform_5, window_bounds = array<i64: 32, 32>}, {pipeline_mode = #tpu.pipeline_mode<synchronous>, transform_indices = @transform_6, window_bounds = array<i64: 1, 32>}, {transform_indices = @transform_7, window_bounds = array<i64: 1, 8, 32>}]} {
    %c0_i32 = arith.constant 0 : i32
    %0 = arith.cmpi eq, %arg1, %c0_i32 : i32
    %1 = arith.extui %0 : i1 to i32
    %c0_i32_0 = arith.constant 0 : i32
    %2 = arith.cmpi ne, %1, %c0_i32_0 : i32
    scf.if %2 {
      %c0_68 = arith.constant 0 : index
      %c0_69 = arith.constant 0 : index
      %139 = vector.load %arg5[%c0_68, %c0_69] : memref<32x32xf32, #tpu.memory_space<vmem>>, vector<32x32xf32>
      %c0_70 = arith.constant 0 : index
      %c0_71 = arith.constant 0 : index
      %c0_72 = arith.constant 0 : index
      %140 = vector.load %arg3[%c0_70, %c0_71, %c0_72] : memref<1x32x8xf32, #tpu.memory_space<vmem>>, vector<1x32x8xf32>
      %141 = vector.shape_cast %140 : vector<1x32x8xf32> to vector<32x8xf32>
      %cst_73 = arith.constant dense<0.000000e+00> : vector<32x8xf32>
      %142 = tpu.matmul %139, %141, %cst_73 {dimension_numbers = #tpu.dot_dimension_numbers<[1], [0], [0], [1], [0, 0, 1, 1], [], []>} : vector<32x32xf32>, vector<32x8xf32>, vector<32x8xf32> -> vector<32x8xf32>
      %c0_74 = arith.constant 0 : index
      %c0_75 = arith.constant 0 : index
      %c0_76 = arith.constant 0 : index
      %143 = vector.load %arg2[%c0_74, %c0_75, %c0_76] : memref<1x8x32xf32, #tpu.memory_space<vmem>>, vector<1x8x32xf32>
      %144 = vector.shape_cast %143 : vector<1x8x32xf32> to vector<8x32xf32>
      %c0_77 = arith.constant 0 : index
      %c0_78 = arith.constant 0 : index
      %145 = vector.load %arg6[%c0_77, %c0_78] : memref<32x32xf32, #tpu.memory_space<vmem>>, vector<32x32xf32>
      %cst_79 = arith.constant dense<0.000000e+00> : vector<8x32xf32>
      %146 = tpu.matmul %144, %145, %cst_79 {dimension_numbers = #tpu.dot_dimension_numbers<[1], [0], [0], [1], [0, 0, 1, 1], [], []>} : vector<8x32xf32>, vector<32x32xf32>, vector<8x32xf32> -> vector<8x32xf32>
      %147 = vector.extract_strided_slice %142 {offsets = [0, 0], sizes = [8, 8], strides = [1, 1]} : vector<32x8xf32> to vector<8x8xf32>
      %c0_80 = arith.constant 0 : index
      %c0_81 = arith.constant 0 : index
      %c0_82 = arith.constant 0 : index
      %c0_83 = arith.constant 0 : index
      %148 = vector.load %arg10[%c0_80, %c0_81, %c0_82, %c0_83] : memref<1x4x8x8xf32, #tpu.memory_space<vmem>>, vector<1x1x8x8xf32>
      %149 = vector.shape_cast %148 : vector<1x1x8x8xf32> to vector<8x8xf32>
      %150 = vector.shape_cast %147 : vector<8x8xf32> to vector<1x1x8x8xf32>
      tpu.vector_store %arg10[%c0_80, %c0_81, %c0_82, %c0_83], %150 {strides = array<i32>} : memref<1x4x8x8xf32, #tpu.memory_space<vmem>>, vector<1x1x8x8xf32>,
      %151 = vector.extract_strided_slice %146 {offsets = [0, 0], sizes = [8, 8], strides = [1, 1]} : vector<8x32xf32> to vector<8x8xf32>
      %c0_84 = arith.constant 0 : index
      %c0_85 = arith.constant 0 : index
      %c0_86 = arith.constant 0 : index
      %c0_87 = arith.constant 0 : index
      %152 = vector.load %arg11[%c0_84, %c0_85, %c0_86, %c0_87] : memref<1x4x8x8xf32, #tpu.memory_space<vmem>>, vector<1x1x8x8xf32>
      %153 = vector.shape_cast %152 : vector<1x1x8x8xf32> to vector<8x8xf32>
      %154 = vector.shape_cast %151 : vector<8x8xf32> to vector<1x1x8x8xf32>
      tpu.vector_store %arg11[%c0_84, %c0_85, %c0_86, %c0_87], %154 {strides = array<i32>} : memref<1x4x8x8xf32, #tpu.memory_space<vmem>>, vector<1x1x8x8xf32>,
      %155 = vector.extract_strided_slice %142 {offsets = [8, 0], sizes = [8, 8], strides = [1, 1]} : vector<32x8xf32> to vector<8x8xf32>
      %c0_88 = arith.constant 0 : index
      %c1_89 = arith.constant 1 : index
      %c0_90 = arith.constant 0 : index
      %c0_91 = arith.constant 0 : index
      %156 = vector.load %arg10[%c0_88, %c1_89, %c0_90, %c0_91] : memref<1x4x8x8xf32, #tpu.memory_space<vmem>>, vector<1x1x8x8xf32>
      %157 = vector.shape_cast %156 : vector<1x1x8x8xf32> to vector<8x8xf32>
      %158 = vector.shape_cast %155 : vector<8x8xf32> to vector<1x1x8x8xf32>
      tpu.vector_store %arg10[%c0_88, %c1_89, %c0_90, %c0_91], %158 {strides = array<i32>} : memref<1x4x8x8xf32, #tpu.memory_space<vmem>>, vector<1x1x8x8xf32>,
      %159 = vector.extract_strided_slice %146 {offsets = [0, 8], sizes = [8, 8], strides = [1, 1]} : vector<8x32xf32> to vector<8x8xf32>
      %c0_92 = arith.constant 0 : index
      %c1_93 = arith.constant 1 : index
      %c0_94 = arith.constant 0 : index
      %c0_95 = arith.constant 0 : index
      %160 = vector.load %arg11[%c0_92, %c1_93, %c0_94, %c0_95] : memref<1x4x8x8xf32, #tpu.memory_space<vmem>>, vector<1x1x8x8xf32>
      %161 = vector.shape_cast %160 : vector<1x1x8x8xf32> to vector<8x8xf32>
      %162 = vector.shape_cast %159 : vector<8x8xf32> to vector<1x1x8x8xf32>
      tpu.vector_store %arg11[%c0_92, %c1_93, %c0_94, %c0_95], %162 {strides = array<i32>} : memref<1x4x8x8xf32, #tpu.memory_space<vmem>>, vector<1x1x8x8xf32>,
      %163 = vector.extract_strided_slice %142 {offsets = [16, 0], sizes = [8, 8], strides = [1, 1]} : vector<32x8xf32> to vector<8x8xf32>
      %c0_96 = arith.constant 0 : index
      %c2_97 = arith.constant 2 : index
      %c0_98 = arith.constant 0 : index
      %c0_99 = arith.constant 0 : index
      %164 = vector.load %arg10[%c0_96, %c2_97, %c0_98, %c0_99] : memref<1x4x8x8xf32, #tpu.memory_space<vmem>>, vector<1x1x8x8xf32>
      %165 = vector.shape_cast %164 : vector<1x1x8x8xf32> to vector<8x8xf32>
      %166 = vector.shape_cast %163 : vector<8x8xf32> to vector<1x1x8x8xf32>
      tpu.vector_store %arg10[%c0_96, %c2_97, %c0_98, %c0_99], %166 {strides = array<i32>} : memref<1x4x8x8xf32, #tpu.memory_space<vmem>>, vector<1x1x8x8xf32>,
      %167 = vector.extract_strided_slice %146 {offsets = [0, 16], sizes = [8, 8], strides = [1, 1]} : vector<8x32xf32> to vector<8x8xf32>
      %c0_100 = arith.constant 0 : index
      %c2_101 = arith.constant 2 : index
      %c0_102 = arith.constant 0 : index
      %c0_103 = arith.constant 0 : index
      %168 = vector.load %arg11[%c0_100, %c2_101, %c0_102, %c0_103] : memref<1x4x8x8xf32, #tpu.memory_space<vmem>>, vector<1x1x8x8xf32>
      %169 = vector.shape_cast %168 : vector<1x1x8x8xf32> to vector<8x8xf32>
      %170 = vector.shape_cast %167 : vector<8x8xf32> to vector<1x1x8x8xf32>
      tpu.vector_store %arg11[%c0_100, %c2_101, %c0_102, %c0_103], %170 {strides = array<i32>} : memref<1x4x8x8xf32, #tpu.memory_space<vmem>>, vector<1x1x8x8xf32>,
      %171 = vector.extract_strided_slice %142 {offsets = [24, 0], sizes = [8, 8], strides = [1, 1]} : vector<32x8xf32> to vector<8x8xf32>
      %c0_104 = arith.constant 0 : index
      %c3_105 = arith.constant 3 : index
      %c0_106 = arith.constant 0 : index
      %c0_107 = arith.constant 0 : index
      %172 = vector.load %arg10[%c0_104, %c3_105, %c0_106, %c0_107] : memref<1x4x8x8xf32, #tpu.memory_space<vmem>>, vector<1x1x8x8xf32>
      %173 = vector.shape_cast %172 : vector<1x1x8x8xf32> to vector<8x8xf32>
      %174 = vector.shape_cast %171 : vector<8x8xf32> to vector<1x1x8x8xf32>
      tpu.vector_store %arg10[%c0_104, %c3_105, %c0_106, %c0_107], %174 {strides = array<i32>} : memref<1x4x8x8xf32, #tpu.memory_space<vmem>>, vector<1x1x8x8xf32>,
      %175 = vector.extract_strided_slice %146 {offsets = [0, 24], sizes = [8, 8], strides = [1, 1]} : vector<8x32xf32> to vector<8x8xf32>
      %c0_108 = arith.constant 0 : index
      %c3_109 = arith.constant 3 : index
      %c0_110 = arith.constant 0 : index
      %c0_111 = arith.constant 0 : index
      %176 = vector.load %arg11[%c0_108, %c3_109, %c0_110, %c0_111] : memref<1x4x8x8xf32, #tpu.memory_space<vmem>>, vector<1x1x8x8xf32>
      %177 = vector.shape_cast %176 : vector<1x1x8x8xf32> to vector<8x8xf32>
      %178 = vector.shape_cast %175 : vector<8x8xf32> to vector<1x1x8x8xf32>
      tpu.vector_store %arg11[%c0_108, %c3_109, %c0_110, %c0_111], %178 {strides = array<i32>} : memref<1x4x8x8xf32, #tpu.memory_space<vmem>>, vector<1x1x8x8xf32>,
    } else {
    }
    %c8_i32 = arith.constant 8 : i32
    %3 = arith.muli %arg1, %c8_i32 : i32
    %4 = tpu.assume_multiple %3, 8 : i32
    %c0 = arith.constant 0 : index
    %5 = arith.index_cast %4 : i32 to index
    %c0_1 = arith.constant 0 : index
    %6 = vector.load %arg2[%c0, %5, %c0_1] : memref<1x8x32xf32, #tpu.memory_space<vmem>>, vector<1x8x32xf32>
    %7 = vector.shape_cast %6 : vector<1x8x32xf32> to vector<8x32xf32>
    %c0_2 = arith.constant 0 : index
    %c0_3 = arith.constant 0 : index
    %8 = vector.load %arg4[%c0_2, %c0_3] : memref<32x32xf32, #tpu.memory_space<vmem>>, vector<32x32xf32>
    %cst = arith.constant dense<0.000000e+00> : vector<8x32xf32>
    %9 = tpu.matmul %7, %8, %cst {dimension_numbers = #tpu.dot_dimension_numbers<[1], [0], [0], [1], [0, 0, 1, 1], [], []>} : vector<8x32xf32>, vector<32x32xf32>, vector<8x32xf32> -> vector<8x32xf32>
    %10 = vector.extract_strided_slice %9 {offsets = [0, 0], sizes = [8, 8], strides = [1, 1]} : vector<8x32xf32> to vector<8x8xf32>
    %cst_4 = arith.constant -1.000000e+30 : f32
    %11 = vector.broadcast %cst_4 : f32 to vector<8x1xf32>
    %cst_5 = arith.constant 0.000000e+00 : f32
    %12 = vector.broadcast %cst_5 : f32 to vector<8x1xf32>
    %cst_6 = arith.constant 0.000000e+00 : f32
    %13 = vector.broadcast %cst_6 : f32 to vector<8x8xf32>
    %c0_i32_7 = arith.constant 0 : i32
    %14 = arith.index_cast %c0_i32_7 : i32 to index
    %c0_8 = arith.constant 0 : index
    %c0_9 = arith.constant 0 : index
    %c0_10 = arith.constant 0 : index
    %15 = vector.load %arg10[%14, %c0_8, %c0_9, %c0_10] : memref<1x4x8x8xf32, #tpu.memory_space<vmem>>, vector<1x1x8x8xf32>
    %16 = vector.shape_cast %15 : vector<1x1x8x8xf32> to vector<8x8xf32>
    %cst_11 = arith.constant dense<0.000000e+00> : vector<8x8xf32>
    %17 = tpu.matmul %10, %16, %cst_11 {dimension_numbers = #tpu.dot_dimension_numbers<[1], [0], [0], [1], [0, 0, 1, 1], [], []>} : vector<8x8xf32>, vector<8x8xf32>, vector<8x8xf32> -> vector<8x8xf32>
    %cst_12 = arith.constant dense<0xFF800000> : vector<8xf32>
    %18 = vector.multi_reduction <maximumf>, %17, %cst_12 [1] : vector<8x8xf32> to vector<8xf32>
    %19 = vector.shape_cast %18 : vector<8xf32> to vector<8x1xf32>
    %20 = arith.maximumf %11, %19 : vector<8x1xf32>
    %21 = arith.subf %11, %20 : vector<8x1xf32>
    %22 = math.exp %21 : vector<8x1xf32>
    %23 = vector.broadcast %20 : vector<8x1xf32> to vector<8x8xf32>
    %24 = arith.subf %17, %23 : vector<8x8xf32>
    %25 = math.exp %24 : vector<8x8xf32>
    %26 = arith.mulf %22, %12 : vector<8x1xf32>
    %cst_13 = arith.constant dense<0.000000e+00> : vector<8xf32>
    %27 = vector.multi_reduction <add>, %25, %cst_13 [1] : vector<8x8xf32> to vector<8xf32>
    %28 = vector.shape_cast %27 : vector<8xf32> to vector<8x1xf32>
    %29 = arith.addf %26, %28 : vector<8x1xf32>
    %30 = arith.index_cast %c0_i32_7 : i32 to index
    %c0_14 = arith.constant 0 : index
    %c0_15 = arith.constant 0 : index
    %c0_16 = arith.constant 0 : index
    %31 = vector.load %arg11[%30, %c0_14, %c0_15, %c0_16] : memref<1x4x8x8xf32, #tpu.memory_space<vmem>>, vector<1x1x8x8xf32>
    %32 = vector.shape_cast %31 : vector<1x1x8x8xf32> to vector<8x8xf32>
    %cst_17 = arith.constant dense<0.000000e+00> : vector<8x8xf32>
    %33 = tpu.matmul %25, %32, %cst_17 {dimension_numbers = #tpu.dot_dimension_numbers<[1], [0], [0], [1], [0, 0, 1, 1], [], []>} : vector<8x8xf32>, vector<8x8xf32>, vector<8x8xf32> -> vector<8x8xf32>
    %34 = vector.broadcast %22 : vector<8x1xf32> to vector<8x8xf32>
    %35 = arith.mulf %34, %13 : vector<8x8xf32>
    %36 = arith.addf %35, %33 : vector<8x8xf32>
    %c1_i32 = arith.constant 1 : i32
    %37 = tpu.reciprocal %29 {approx = true} : vector<8x1xf32> -> vector<8x1xf32>
    %38 = vector.broadcast %37 : vector<8x1xf32> to vector<8x8xf32>
    %39 = arith.mulf %36, %38 : vector<8x8xf32>
    %40 = vector.extract_strided_slice %9 {offsets = [0, 8], sizes = [8, 8], strides = [1, 1]} : vector<8x32xf32> to vector<8x8xf32>
    %cst_18 = arith.constant -1.000000e+30 : f32
    %41 = vector.broadcast %cst_18 : f32 to vector<8x1xf32>
    %cst_19 = arith.constant 0.000000e+00 : f32
    %42 = vector.broadcast %cst_19 : f32 to vector<8x1xf32>
    %cst_20 = arith.constant 0.000000e+00 : f32
    %43 = vector.broadcast %cst_20 : f32 to vector<8x8xf32>
    %c0_i32_21 = arith.constant 0 : i32
    %44 = arith.index_cast %c0_i32_21 : i32 to index
    %c1 = arith.constant 1 : index
    %c0_22 = arith.constant 0 : index
    %c0_23 = arith.constant 0 : index
    %45 = vector.load %arg10[%44, %c1, %c0_22, %c0_23] : memref<1x4x8x8xf32, #tpu.memory_space<vmem>>, vector<1x1x8x8xf32>
    %46 = vector.shape_cast %45 : vector<1x1x8x8xf32> to vector<8x8xf32>
    %cst_24 = arith.constant dense<0.000000e+00> : vector<8x8xf32>
    %47 = tpu.matmul %40, %46, %cst_24 {dimension_numbers = #tpu.dot_dimension_numbers<[1], [0], [0], [1], [0, 0, 1, 1], [], []>} : vector<8x8xf32>, vector<8x8xf32>, vector<8x8xf32> -> vector<8x8xf32>
    %cst_25 = arith.constant dense<0xFF800000> : vector<8xf32>
    %48 = vector.multi_reduction <maximumf>, %47, %cst_25 [1] : vector<8x8xf32> to vector<8xf32>
    %49 = vector.shape_cast %48 : vector<8xf32> to vector<8x1xf32>
    %50 = arith.maximumf %41, %49 : vector<8x1xf32>
    %51 = arith.subf %41, %50 : vector<8x1xf32>
    %52 = math.exp %51 : vector<8x1xf32>
    %53 = vector.broadcast %50 : vector<8x1xf32> to vector<8x8xf32>
    %54 = arith.subf %47, %53 : vector<8x8xf32>
    %55 = math.exp %54 : vector<8x8xf32>
    %56 = arith.mulf %52, %42 : vector<8x1xf32>
    %cst_26 = arith.constant dense<0.000000e+00> : vector<8xf32>
    %57 = vector.multi_reduction <add>, %55, %cst_26 [1] : vector<8x8xf32> to vector<8xf32>
    %58 = vector.shape_cast %57 : vector<8xf32> to vector<8x1xf32>
    %59 = arith.addf %56, %58 : vector<8x1xf32>
    %60 = arith.index_cast %c0_i32_21 : i32 to index
    %c1_27 = arith.constant 1 : index
    %c0_28 = arith.constant 0 : index
    %c0_29 = arith.constant 0 : index
    %61 = vector.load %arg11[%60, %c1_27, %c0_28, %c0_29] : memref<1x4x8x8xf32, #tpu.memory_space<vmem>>, vector<1x1x8x8xf32>
    %62 = vector.shape_cast %61 : vector<1x1x8x8xf32> to vector<8x8xf32>
    %cst_30 = arith.constant dense<0.000000e+00> : vector<8x8xf32>
    %63 = tpu.matmul %55, %62, %cst_30 {dimension_numbers = #tpu.dot_dimension_numbers<[1], [0], [0], [1], [0, 0, 1, 1], [], []>} : vector<8x8xf32>, vector<8x8xf32>, vector<8x8xf32> -> vector<8x8xf32>
    %64 = vector.broadcast %52 : vector<8x1xf32> to vector<8x8xf32>
    %65 = arith.mulf %64, %43 : vector<8x8xf32>
    %66 = arith.addf %65, %63 : vector<8x8xf32>
    %c1_i32_31 = arith.constant 1 : i32
    %67 = tpu.reciprocal %59 {approx = true} : vector<8x1xf32> -> vector<8x1xf32>
    %68 = vector.broadcast %67 : vector<8x1xf32> to vector<8x8xf32>
    %69 = arith.mulf %66, %68 : vector<8x8xf32>
    %70 = vector.extract_strided_slice %9 {offsets = [0, 16], sizes = [8, 8], strides = [1, 1]} : vector<8x32xf32> to vector<8x8xf32>
    %cst_32 = arith.constant -1.000000e+30 : f32
    %71 = vector.broadcast %cst_32 : f32 to vector<8x1xf32>
    %cst_33 = arith.constant 0.000000e+00 : f32
    %72 = vector.broadcast %cst_33 : f32 to vector<8x1xf32>
    %cst_34 = arith.constant 0.000000e+00 : f32
    %73 = vector.broadcast %cst_34 : f32 to vector<8x8xf32>
    %c0_i32_35 = arith.constant 0 : i32
    %74 = arith.index_cast %c0_i32_35 : i32 to index
    %c2 = arith.constant 2 : index
    %c0_36 = arith.constant 0 : index
    %c0_37 = arith.constant 0 : index
    %75 = vector.load %arg10[%74, %c2, %c0_36, %c0_37] : memref<1x4x8x8xf32, #tpu.memory_space<vmem>>, vector<1x1x8x8xf32>
    %76 = vector.shape_cast %75 : vector<1x1x8x8xf32> to vector<8x8xf32>
    %cst_38 = arith.constant dense<0.000000e+00> : vector<8x8xf32>
    %77 = tpu.matmul %70, %76, %cst_38 {dimension_numbers = #tpu.dot_dimension_numbers<[1], [0], [0], [1], [0, 0, 1, 1], [], []>} : vector<8x8xf32>, vector<8x8xf32>, vector<8x8xf32> -> vector<8x8xf32>
    %cst_39 = arith.constant dense<0xFF800000> : vector<8xf32>
    %78 = vector.multi_reduction <maximumf>, %77, %cst_39 [1] : vector<8x8xf32> to vector<8xf32>
    %79 = vector.shape_cast %78 : vector<8xf32> to vector<8x1xf32>
    %80 = arith.maximumf %71, %79 : vector<8x1xf32>
    %81 = arith.subf %71, %80 : vector<8x1xf32>
    %82 = math.exp %81 : vector<8x1xf32>
    %83 = vector.broadcast %80 : vector<8x1xf32> to vector<8x8xf32>
    %84 = arith.subf %77, %83 : vector<8x8xf32>
    %85 = math.exp %84 : vector<8x8xf32>
    %86 = arith.mulf %82, %72 : vector<8x1xf32>
    %cst_40 = arith.constant dense<0.000000e+00> : vector<8xf32>
    %87 = vector.multi_reduction <add>, %85, %cst_40 [1] : vector<8x8xf32> to vector<8xf32>
    %88 = vector.shape_cast %87 : vector<8xf32> to vector<8x1xf32>
    %89 = arith.addf %86, %88 : vector<8x1xf32>
    %90 = arith.index_cast %c0_i32_35 : i32 to index
    %c2_41 = arith.constant 2 : index
    %c0_42 = arith.constant 0 : index
    %c0_43 = arith.constant 0 : index
    %91 = vector.load %arg11[%90, %c2_41, %c0_42, %c0_43] : memref<1x4x8x8xf32, #tpu.memory_space<vmem>>, vector<1x1x8x8xf32>
    %92 = vector.shape_cast %91 : vector<1x1x8x8xf32> to vector<8x8xf32>
    %cst_44 = arith.constant dense<0.000000e+00> : vector<8x8xf32>
    %93 = tpu.matmul %85, %92, %cst_44 {dimension_numbers = #tpu.dot_dimension_numbers<[1], [0], [0], [1], [0, 0, 1, 1], [], []>} : vector<8x8xf32>, vector<8x8xf32>, vector<8x8xf32> -> vector<8x8xf32>
    %94 = vector.broadcast %82 : vector<8x1xf32> to vector<8x8xf32>
    %95 = arith.mulf %94, %73 : vector<8x8xf32>
    %96 = arith.addf %95, %93 : vector<8x8xf32>
    %c1_i32_45 = arith.constant 1 : i32
    %97 = tpu.reciprocal %89 {approx = true} : vector<8x1xf32> -> vector<8x1xf32>
    %98 = vector.broadcast %97 : vector<8x1xf32> to vector<8x8xf32>
    %99 = arith.mulf %96, %98 : vector<8x8xf32>
    %100 = vector.extract_strided_slice %9 {offsets = [0, 24], sizes = [8, 8], strides = [1, 1]} : vector<8x32xf32> to vector<8x8xf32>
    %cst_46 = arith.constant -1.000000e+30 : f32
    %101 = vector.broadcast %cst_46 : f32 to vector<8x1xf32>
    %cst_47 = arith.constant 0.000000e+00 : f32
    %102 = vector.broadcast %cst_47 : f32 to vector<8x1xf32>
    %cst_48 = arith.constant 0.000000e+00 : f32
    %103 = vector.broadcast %cst_48 : f32 to vector<8x8xf32>
    %c0_i32_49 = arith.constant 0 : i32
    %104 = arith.index_cast %c0_i32_49 : i32 to index
    %c3 = arith.constant 3 : index
    %c0_50 = arith.constant 0 : index
    %c0_51 = arith.constant 0 : index
    %105 = vector.load %arg10[%104, %c3, %c0_50, %c0_51] : memref<1x4x8x8xf32, #tpu.memory_space<vmem>>, vector<1x1x8x8xf32>
    %106 = vector.shape_cast %105 : vector<1x1x8x8xf32> to vector<8x8xf32>
    %cst_52 = arith.constant dense<0.000000e+00> : vector<8x8xf32>
    %107 = tpu.matmul %100, %106, %cst_52 {dimension_numbers = #tpu.dot_dimension_numbers<[1], [0], [0], [1], [0, 0, 1, 1], [], []>} : vector<8x8xf32>, vector<8x8xf32>, vector<8x8xf32> -> vector<8x8xf32>
    %cst_53 = arith.constant dense<0xFF800000> : vector<8xf32>
    %108 = vector.multi_reduction <maximumf>, %107, %cst_53 [1] : vector<8x8xf32> to vector<8xf32>
    %109 = vector.shape_cast %108 : vector<8xf32> to vector<8x1xf32>
    %110 = arith.maximumf %101, %109 : vector<8x1xf32>
    %111 = arith.subf %101, %110 : vector<8x1xf32>
    %112 = math.exp %111 : vector<8x1xf32>
    %113 = vector.broadcast %110 : vector<8x1xf32> to vector<8x8xf32>
    %114 = arith.subf %107, %113 : vector<8x8xf32>
    %115 = math.exp %114 : vector<8x8xf32>
    %116 = arith.mulf %112, %102 : vector<8x1xf32>
    %cst_54 = arith.constant dense<0.000000e+00> : vector<8xf32>
    %117 = vector.multi_reduction <add>, %115, %cst_54 [1] : vector<8x8xf32> to vector<8xf32>
    %118 = vector.shape_cast %117 : vector<8xf32> to vector<8x1xf32>
    %119 = arith.addf %116, %118 : vector<8x1xf32>
    %120 = arith.index_cast %c0_i32_49 : i32 to index
    %c3_55 = arith.constant 3 : index
    %c0_56 = arith.constant 0 : index
    %c0_57 = arith.constant 0 : index
    %121 = vector.load %arg11[%120, %c3_55, %c0_56, %c0_57] : memref<1x4x8x8xf32, #tpu.memory_space<vmem>>, vector<1x1x8x8xf32>
    %122 = vector.shape_cast %121 : vector<1x1x8x8xf32> to vector<8x8xf32>
    %cst_58 = arith.constant dense<0.000000e+00> : vector<8x8xf32>
    %123 = tpu.matmul %115, %122, %cst_58 {dimension_numbers = #tpu.dot_dimension_numbers<[1], [0], [0], [1], [0, 0, 1, 1], [], []>} : vector<8x8xf32>, vector<8x8xf32>, vector<8x8xf32> -> vector<8x8xf32>
    %124 = vector.broadcast %112 : vector<8x1xf32> to vector<8x8xf32>
    %125 = arith.mulf %124, %103 : vector<8x8xf32>
    %126 = arith.addf %125, %123 : vector<8x8xf32>
    %c1_i32_59 = arith.constant 1 : i32
    %127 = tpu.reciprocal %119 {approx = true} : vector<8x1xf32> -> vector<8x1xf32>
    %128 = vector.broadcast %127 : vector<8x1xf32> to vector<8x8xf32>
    %129 = arith.mulf %126, %128 : vector<8x8xf32>
    %130 = tpu.concatenate %39, %69, %99, %129 in 1 : vector<8x8xf32>, vector<8x8xf32>, vector<8x8xf32>, vector<8x8xf32> -> vector<8x32xf32>
    %c0_60 = arith.constant 0 : index
    %c0_61 = arith.constant 0 : index
    %131 = vector.load %arg7[%c0_60, %c0_61] : memref<32x32xf32, #tpu.memory_space<vmem>>, vector<32x32xf32>
    %cst_62 = arith.constant dense<0.000000e+00> : vector<8x32xf32>
    %132 = tpu.matmul %130, %131, %cst_62 {dimension_numbers = #tpu.dot_dimension_numbers<[1], [0], [0], [1], [0, 0, 1, 1], [], []>} : vector<8x32xf32>, vector<32x32xf32>, vector<8x32xf32> -> vector<8x32xf32>
    %c0_63 = arith.constant 0 : index
    %c0_64 = arith.constant 0 : index
    %133 = vector.load %arg8[%c0_63, %c0_64] : memref<1x32xf32, #tpu.memory_space<vmem>>, vector<1x32xf32>
    %134 = vector.broadcast %133 : vector<1x32xf32> to vector<8x32xf32>
    %135 = arith.addf %132, %134 : vector<8x32xf32>
    %c0_65 = arith.constant 0 : index
    %c0_66 = arith.constant 0 : index
    %c0_67 = arith.constant 0 : index
    %136 = vector.load %arg9[%c0_65, %c0_66, %c0_67] : memref<1x8x32xf32, #tpu.memory_space<vmem>>, vector<1x8x32xf32>
    %137 = vector.shape_cast %136 : vector<1x8x32xf32> to vector<8x32xf32>
    %138 = vector.shape_cast %135 : vector<8x32xf32> to vector<1x8x32xf32>
    tpu.vector_store %arg9[%c0_65, %c0_66, %c0_67], %138 {strides = array<i32>} : memref<1x8x32xf32, #tpu.memory_space<vmem>>, vector<1x8x32xf32>,
    return
  }
  func.func @transform_0(%arg0: i32, %arg1: i32) -> (i32, i32, i32) {
    %c0_i32 = arith.constant 0 : i32
    %c0_i32_0 = arith.constant 0 : i32
    %c0_i32_1 = arith.constant 0 : i32
    return %arg0, %c0_i32, %c0_i32_0 : i32, i32, i32
  }
  func.func @transform_1(%arg0: i32, %arg1: i32) -> (i32, i32, i32) {
    %c0_i32 = arith.constant 0 : i32
    %c0_i32_0 = arith.constant 0 : i32
    %c0_i32_1 = arith.constant 0 : i32
    return %arg0, %c0_i32, %c0_i32_0 : i32, i32, i32
  }
  func.func @transform_2(%arg0: i32, %arg1: i32) -> (i32, i32) {
    %c0_i32 = arith.constant 0 : i32
    %c0_i32_0 = arith.constant 0 : i32
    %c0_i32_1 = arith.constant 0 : i32
    return %c0_i32, %c0_i32_0 : i32, i32
  }
  func.func @transform_3(%arg0: i32, %arg1: i32) -> (i32, i32) {
    %c0_i32 = arith.constant 0 : i32
    %c0_i32_0 = arith.constant 0 : i32
    %c0_i32_1 = arith.constant 0 : i32
    return %c0_i32, %c0_i32_0 : i32, i32
  }
  func.func @transform_4(%arg0: i32, %arg1: i32) -> (i32, i32) {
    %c0_i32 = arith.constant 0 : i32
    %c0_i32_0 = arith.constant 0 : i32
    %c0_i32_1 = arith.constant 0 : i32
    return %c0_i32, %c0_i32_0 : i32, i32
  }
  func.func @transform_5(%arg0: i32, %arg1: i32) -> (i32, i32) {
    %c0_i32 = arith.constant 0 : i32
    %c0_i32_0 = arith.constant 0 : i32
    %c0_i32_1 = arith.constant 0 : i32
    return %c0_i32, %c0_i32_0 : i32, i32
  }
  func.func @transform_6(%arg0: i32, %arg1: i32) -> (i32, i32) {
    %c0_i32 = arith.constant 0 : i32
    %c0_i32_0 = arith.constant 0 : i32
    %c0_i32_1 = arith.constant 0 : i32
    return %c0_i32, %c0_i32_0 : i32, i32
  }
  func.func @transform_7(%arg0: i32, %arg1: i32) -> (i32, i32, i32) {
    %c0_i32 = arith.constant 0 : i32
    %c0_i32_0 = arith.constant 0 : i32
    return %arg0, %arg1, %c0_i32 : i32, i32, i32
  }
}

</mosaic_0001>

<llo_original>
// kernel: tpu_custom_call.1
$region0: #{tpu_custom_call.1}
  #allocation0 [shape = 'u32[]', space=smem, size = 0x4, offset = 0x4, fixed_abs, tag = 'smem constant byte address 0x4 - core index']
  #allocation1 [shape = 'u32[144,128]{1,0:T(1,128)}', space=vmem, size = 0x12000, scoped, tag = 'internal scratch']
  #allocation2 [shape = 'f32[1,4,8,8]{3,2,1,0:T(8,128)}', space=vmem, size = 0x4000, scoped, tag = 'scratch operand']
  #allocation3 [shape = 'f32[1,4,8,8]{3,2,1,0:T(8,128)}', space=vmem, size = 0x4000, scoped, tag = 'scratch operand']
  %s0 = inlined_call_operand.vmem [shape: f32[2,8,32], index: 0, kind: input, shape index: {}]
  %s1 = inlined_call_operand.vmem [shape: f32[2,32,8], index: 1, kind: input, shape index: {}]
  %s2 = inlined_call_operand.vmem [shape: f32[32,32], index: 2, kind: input, shape index: {}]
  %s3 = inlined_call_operand.vmem [shape: f32[32,32], index: 3, kind: input, shape index: {}]
  %s4 = inlined_call_operand.hbm [shape: f32[32,32], index: 4, kind: input, shape index: {}]
  %s5 = inlined_call_operand.hbm [shape: f32[32,32], index: 5, kind: input, shape index: {}]
  %s6 = inlined_call_operand.vmem [shape: f32[1,32], index: 6, kind: input, shape index: {}]
  %s7 = inlined_call_operand.hbm [shape: f32[2,8,32], index: 7, kind: output, shape index: {}]
  %s8 = sld [smem:[#allocation0]]
  $region73: #{tpu_custom_call.1} parent=0
    _
  %s10 = ssub.s32 1, %s8
  %s11 = scalar_select 0, %s10, %s8
  $region1: #{tpu_custom_call.1} parent=0
    #allocation4 [shape = 'u8[16384]{0}', space=vmem, size = 0x4000, scoped, tag = 'input window, operand 4, single buffered']
    #allocation5 [shape = 's32[2]{0}', space=sflag, size = 0x8, scoped, tag = 'scoped memory for tpu_custom_call.1']
    #allocation6 [shape = 's32[2]{0}', space=sflag, size = 0x8, scoped, tag = 'scoped memory for tpu_custom_call.1']
    #allocation7 [shape = 'u8[16384]{0}', space=vmem, size = 0x4000, scoped, tag = 'input window, operand 5, single buffered']
    #allocation8 [shape = 's32[1]{0}', space=sflag, size = 0x4, scoped, tag = 'scoped memory for tpu_custom_call.1']
    #allocation9 [shape = 'u8[8192]{0}', space=vmem, size = 0x2000, scoped, tag = 'output window, operand 0']
    %12 = vsyncpa [#allocation5], 0
    %13 = vsyncpa [#allocation8], 0
    %14 = vsyncpa [#allocation6], 0
    %s15 = scalar_lea.sflag [#allocation6], 1
    %16 = vsyncpa %s15, 0
    loop: start=0, step=1, limit=4
    $region2: #{tpu_custom_call.1} parent=1 // loop_pre_header
      _
    $region3: #{tpu_custom_call.1} parent=1 // loop_header
      %s18 = sphi 0, %s22
      %p19 = scmp.ge.s32.totalorder %s18, 4
      %s25 = sphi 0, %s37
      %s26 = sphi 0, %s33
      %s27 = sphi 0, %s25
      %s28 = sphi 0, %s26
      %s29 = sphi 0, %s27
      %s30 = sphi 0, %s28
      %s40 = sphi 0, %s42
      %s43 = sphi 0, %s40
      %s44 = sphi 0, %s43
      %s60 = sphi 0, %s44
      %s66 = sphi 0, %s68
      %s69 = sphi 0, %s66
      %s70 = sphi 0, %s69
      %s86 = sphi 0, %s70
      %s90 = sphi 0, %s90
      %s92 = sphi 0, %s90
      %s93 = sphi 0, %s92
      %s107 = sphi 0, %s93
      %s111 = sphi 0, %s111
      %s113 = sphi 0, %s111
      %s114 = sphi 0, %s113
      %s128 = sphi 0, %s114
      %s132 = sphi 0, %s132
      %s134 = sphi 0, %s132
      %s135 = sphi 0, %s134
      %s149 = sphi 0, %s135
      %s153 = sphi 0, %s153
      %s155 = sphi 0, %s153
      %s156 = sphi 0, %s155
      %s170 = sphi 0, %s156
      %s174 = sphi 0, %s174
      %s176 = sphi 0, %s174
      %s177 = sphi 0, %s176
      %s191 = sphi 0, %s177
      %s199 = sphi 0, %s201
      %s202 = sphi 0, %s199
      %s203 = sphi 0, %s202
      %s219 = sphi 0, %s203
    $region4: #{tpu_custom_call.1} parent=1 // loop_header_branch
      %21 = sbr.rel (%p19) target = $region8
    $region5: #{tpu_custom_call.1} parent=1 // loop_body
      %s23 = ssub.s32 %s18, 1
      %s24 = ssub.s32 %s18, 2
      %s31 = sadd.s32 1, %s26
      %p32 = scmp.ge.s32.totalorder %s31, 1
      %s33 = scalar_select %p32, 0, %s31
      %s34 = sadd.s32 1, %s25
      %s35 = scalar_select %p32, %s34, %s25
      %p36 = scmp.ge.s32.totalorder %s35, 2
      %s37 = scalar_select %p36, 0, %s35
      %s38 = ssub.s32 %s25, %s37
      %p39 = scmp.eq.s32.totalorder %s38, 0
      %s41 = sadd.s32 %s40, 1
      %s42 = scalar_select %p39, %s40, %s41
      %p45 = pneg %p39
      %p46 = scmp.eq.s32.totalorder %s18, 1
      %p47 = por %p45, %p46
      %p48 = scmp.ne.s32.totalorder %s40, %s43
      %p49 = scmp.eq.s32.totalorder %s18, 0
      %p50 = por %p48, %p49
      %p51 = scmp.ne.s32.totalorder %s40, %s43
      %p52 = scmp.eq.s32.totalorder %s23, 1
      %p53 = por %p51, %p52
      %p54 = scmp.ne.s32.totalorder %s43, %s44
      %p55 = scmp.eq.s32.totalorder %s23, 0
      %p56 = por %p54, %p55
      %p57 = scmp.ne.s32.totalorder %s43, %s44
      %p58 = scmp.eq.s32.totalorder %s24, 1
      %p59 = por %p57, %p58
      %p61 = scmp.ne.s32.totalorder %s44, %s60
      %p62 = scmp.eq.s32.totalorder %s24, 0
      %p63 = por %p61, %p62
      %s64 = ssub.s32 %s25, %s37
      %p65 = scmp.eq.s32.totalorder %s64, 0
      %s67 = sadd.s32 %s66, 1
      %s68 = scalar_select %p65, %s66, %s67
      %p71 = pneg %p65
      %p72 = scmp.eq.s32.totalorder %s18, 1
      %p73 = por %p71, %p72
      %p74 = scmp.ne.s32.totalorder %s66, %s69
      %p75 = scmp.eq.s32.totalorder %s18, 0
      %p76 = por %p74, %p75
      %p77 = scmp.ne.s32.totalorder %s66, %s69
      %p78 = scmp.eq.s32.totalorder %s23, 1
      %p79 = por %p77, %p78
      %p80 = scmp.ne.s32.totalorder %s69, %s70
      %p81 = scmp.eq.s32.totalorder %s23, 0
      %p82 = por %p80, %p81
      %p83 = scmp.ne.s32.totalorder %s69, %s70
      %p84 = scmp.eq.s32.totalorder %s24, 1
      %p85 = por %p83, %p84
      %p87 = scmp.ne.s32.totalorder %s70, %s86
      %p88 = scmp.eq.s32.totalorder %s24, 0
      %p89 = por %p87, %p88
      %s91 = sadd.s32 %s90, 1
      %p94 = scmp.eq.s32.totalorder %s18, 1
      %p95 = scmp.ne.s32.totalorder %s90, %s92
      %p96 = scmp.eq.s32.totalorder %s18, 0
      %p97 = por %p95, %p96
      %p98 = scmp.ne.s32.totalorder %s90, %s92
      %p99 = scmp.eq.s32.totalorder %s23, 1
      %p100 = por %p98, %p99
      %p101 = scmp.ne.s32.totalorder %s92, %s93
      %p102 = scmp.eq.s32.totalorder %s23, 0
      %p103 = por %p101, %p102
      %p104 = scmp.ne.s32.totalorder %s92, %s93
      %p105 = scmp.eq.s32.totalorder %s24, 1
      %p106 = por %p104, %p105
      %p108 = scmp.ne.s32.totalorder %s93, %s107
      %p109 = scmp.eq.s32.totalorder %s24, 0
      %p110 = por %p108, %p109
      %s112 = sadd.s32 %s111, 1
      %p115 = scmp.eq.s32.totalorder %s18, 1
      %p116 = scmp.ne.s32.totalorder %s111, %s113
      %p117 = scmp.eq.s32.totalorder %s18, 0
      %p118 = por %p116, %p117
      %p119 = scmp.ne.s32.totalorder %s111, %s113
      %p120 = scmp.eq.s32.totalorder %s23, 1
      %p121 = por %p119, %p120
      %p122 = scmp.ne.s32.totalorder %s113, %s114
      %p123 = scmp.eq.s32.totalorder %s23, 0
      %p124 = por %p122, %p123
      %p125 = scmp.ne.s32.totalorder %s113, %s114
      %p126 = scmp.eq.s32.totalorder %s24, 1
      %p127 = por %p125, %p126
      %p129 = scmp.ne.s32.totalorder %s114, %s128
      %p130 = scmp.eq.s32.totalorder %s24, 0
      %p131 = por %p129, %p130
      %s133 = sadd.s32 %s132, 1
      %p136 = scmp.eq.s32.totalorder %s18, 1
      %p137 = scmp.ne.s32.totalorder %s132, %s134
      %p138 = scmp.eq.s32.totalorder %s18, 0
      %p139 = por %p137, %p138
      %p140 = scmp.ne.s32.totalorder %s132, %s134
      %p141 = scmp.eq.s32.totalorder %s23, 1
      %p142 = por %p140, %p141
      %p143 = scmp.ne.s32.totalorder %s134, %s135
      %p144 = scmp.eq.s32.totalorder %s23, 0
      %p145 = por %p143, %p144
      %p146 = scmp.ne.s32.totalorder %s134, %s135
      %p147 = scmp.eq.s32.totalorder %s24, 1
      %p148 = por %p146, %p147
      %p150 = scmp.ne.s32.totalorder %s135, %s149
      %p151 = scmp.eq.s32.totalorder %s24, 0
      %p152 = por %p150, %p151
      %s154 = sadd.s32 %s153, 1
      %p157 = scmp.eq.s32.totalorder %s18, 1
      %p158 = scmp.ne.s32.totalorder %s153, %s155
      %p159 = scmp.eq.s32.totalorder %s18, 0
      %p160 = por %p158, %p159
      %p161 = scmp.ne.s32.totalorder %s153, %s155
      %p162 = scmp.eq.s32.totalorder %s23, 1
      %p163 = por %p161, %p162
      %p164 = scmp.ne.s32.totalorder %s155, %s156
      %p165 = scmp.eq.s32.totalorder %s23, 0
      %p166 = por %p164, %p165
      %p167 = scmp.ne.s32.totalorder %s155, %s156
      %p168 = scmp.eq.s32.totalorder %s24, 1
      %p169 = por %p167, %p168
      %p171 = scmp.ne.s32.totalorder %s156, %s170
      %p172 = scmp.eq.s32.totalorder %s24, 0
      %p173 = por %p171, %p172
      %s175 = sadd.s32 %s174, 1
      %p178 = scmp.eq.s32.totalorder %s18, 1
      %p179 = scmp.ne.s32.totalorder %s174, %s176
      %p180 = scmp.eq.s32.totalorder %s18, 0
      %p181 = por %p179, %p180
      %p182 = scmp.ne.s32.totalorder %s174, %s176
      %p183 = scmp.eq.s32.totalorder %s23, 1
      %p184 = por %p182, %p183
      %p185 = scmp.ne.s32.totalorder %s176, %s177
      %p186 = scmp.eq.s32.totalorder %s23, 0
      %p187 = por %p185, %p186
      %p188 = scmp.ne.s32.totalorder %s176, %s177
      %p189 = scmp.eq.s32.totalorder %s24, 1
      %p190 = por %p188, %p189
      %p192 = scmp.ne.s32.totalorder %s177, %s191
      %p193 = scmp.eq.s32.totalorder %s24, 0
      %p194 = por %p192, %p193
      %s195 = ssub.s32 %s25, %s37
      %s196 = ssub.s32 %s26, %s33
      %s197 = sor.u32 %s195, %s196
      %p198 = scmp.eq.s32.totalorder %s197, 0
      %s200 = sadd.s32 %s199, 1
      %s201 = scalar_select %p198, %s199, %s200
      %p204 = pneg %p198
      %p205 = scmp.eq.s32.totalorder %s18, 1
      %p206 = por %p204, %p205
      %p207 = scmp.ne.s32.totalorder %s199, %s202
      %p208 = scmp.eq.s32.totalorder %s18, 0
      %p209 = por %p207, %p208
      %p210 = scmp.ne.s32.totalorder %s199, %s202
      %p211 = scmp.eq.s32.totalorder %s23, 1
      %p212 = por %p210, %p211
      %p213 = scmp.ne.s32.totalorder %s202, %s203
      %p214 = scmp.eq.s32.totalorder %s23, 0
      %p215 = por %p213, %p214
      %p216 = scmp.ne.s32.totalorder %s202, %s203
      %p217 = scmp.eq.s32.totalorder %s24, 1
      %p218 = por %p216, %p217
      %p220 = scmp.ne.s32.totalorder %s203, %s219
      %p221 = scmp.eq.s32.totalorder %s24, 0
      %p222 = por %p220, %p221
      %p223 = scmp.le.s32.totalorder 1, %s18
      %p224 = scmp.lt.s32.totalorder %s18, 3
      %p225 = pnand %p223, %p224
      %p226 = pneg %p225
      // Predicated region
      $region9: #{tpu_custom_call.1} parent=5 // pred_check
        _
      $region10: #{tpu_custom_call.1} parent=5 // pred_check_branch
        %228 = sbr.rel (%p225) target = $region12
      $region11: #{tpu_custom_call.1} parent=5 // pred_region
        %s229 = ssub.s32 %s18, 1
        // Predicated region
        $region13: #{tpu_custom_call.1} parent=11 // pred_check
          %p230 = pneg %p103
        $region14: #{tpu_custom_call.1} parent=11 // pred_check_branch
          %232 = sbr.rel (%p230) target = $region16
        $region15: #{tpu_custom_call.1} parent=11 // pred_region
          _
        $region16: #{tpu_custom_call.1} parent=11 // pred_fallthru
          _
        // Predicated region
        $region17: #{tpu_custom_call.1} parent=11 // pred_check
          %p233 = pneg %p124
        $region18: #{tpu_custom_call.1} parent=11 // pred_check_branch
          %235 = sbr.rel (%p233) target = $region20
        $region19: #{tpu_custom_call.1} parent=11 // pred_region
          _
        $region20: #{tpu_custom_call.1} parent=11 // pred_fallthru
          _
        // Predicated region
        $region21: #{tpu_custom_call.1} parent=11 // pred_check
          %p236 = pneg %p145
        $region22: #{tpu_custom_call.1} parent=11 // pred_check_branch
          %238 = sbr.rel (%p236) target = $region24
        $region23: #{tpu_custom_call.1} parent=11 // pred_region
          %s240 = ssub.s32 512, 512
          %241 = vsyncadd [#allocation5], %s240
          %s242 = sshll.u32 [#allocation4], 4
          %s243 = int_to_ptr.vmem [resolvable:$true] %s242
          %248 = dma.hbm_to_vmem [thread:$0]  %s4, 512, %s243, [#allocation5], 128, 128, 8
        $region24: #{tpu_custom_call.1} parent=11 // pred_fallthru
          _
        // Predicated region
        $region25: #{tpu_custom_call.1} parent=11 // pred_check
          %p249 = pneg %p166
        $region26: #{tpu_custom_call.1} parent=11 // pred_check_branch
          %251 = sbr.rel (%p249) target = $region28
        $region27: #{tpu_custom_call.1} parent=11 // pred_region
          %s253 = ssub.s32 512, 512
          %254 = vsyncadd [#allocation8], %s253
          %s255 = sshll.u32 [#allocation7], 4
          %s256 = int_to_ptr.vmem [resolvable:$true] %s255
          %261 = dma.hbm_to_vmem [thread:$0]  %s5, 512, %s256, [#allocation8], 128, 128, 8
        $region28: #{tpu_custom_call.1} parent=11 // pred_fallthru
          _
        // Predicated region
        $region29: #{tpu_custom_call.1} parent=11 // pred_check
          %p262 = pneg %p187
        $region30: #{tpu_custom_call.1} parent=11 // pred_check_branch
          %264 = sbr.rel (%p262) target = $region32
        $region31: #{tpu_custom_call.1} parent=11 // pred_region
          _
        $region32: #{tpu_custom_call.1} parent=11 // pred_fallthru
          _
      $region12: #{tpu_custom_call.1} parent=5 // pred_fallthru
        _
      %p265 = scmp.lt.s32.totalorder %s18, 2
      // Predicated region
      $region33: #{tpu_custom_call.1} parent=5 // pred_check
        %p266 = pneg %p265
      $region34: #{tpu_custom_call.1} parent=5 // pred_check_branch
        %268 = sbr.rel (%p266) target = $region36
      $region35: #{tpu_custom_call.1} parent=5 // pred_region
        // Predicated region
        $region37: #{tpu_custom_call.1} parent=35 // pred_check
          %p269 = pneg %p50
        $region38: #{tpu_custom_call.1} parent=35 // pred_check_branch
          %271 = sbr.rel (%p269) target = $region40
        $region39: #{tpu_custom_call.1} parent=35 // pred_region
          %p272 = scmp.lt.s32.totalorder %s25, 1
          %s273 = scalar_select %p272, %s25, 1
          %s274 = smul.addr %s273, 8
          %s275 = scalar_lea.vmem %s0, %s274
        $region40: #{tpu_custom_call.1} parent=35 // pred_fallthru
          _
        // Predicated region
        $region41: #{tpu_custom_call.1} parent=35 // pred_check
          %p276 = pneg %p76
        $region42: #{tpu_custom_call.1} parent=35 // pred_check_branch
          %278 = sbr.rel (%p276) target = $region44
        $region43: #{tpu_custom_call.1} parent=35 // pred_region
          %p279 = scmp.lt.s32.totalorder %s25, 1
          %s280 = scalar_select %p279, %s25, 1
          %s281 = smul.addr %s280, 4
          %s282 = smul.addr %s281, 8
          %s283 = scalar_lea.vmem %s1, %s282
        $region44: #{tpu_custom_call.1} parent=35 // pred_fallthru
          _
      $region36: #{tpu_custom_call.1} parent=5 // pred_fallthru
        _
      %p284 = scmp.le.s32.totalorder 1, %s18
      %p285 = scmp.lt.s32.totalorder %s18, 3
      %p286 = pnand %p284, %p285
      %p287 = pneg %p286
      // Predicated region
      $region45: #{tpu_custom_call.1} parent=5 // pred_check
        _
      $region46: #{tpu_custom_call.1} parent=5 // pred_check_branch
        %289 = sbr.rel (%p286) target = $region48
      $region47: #{tpu_custom_call.1} parent=5 // pred_region
        %s290 = ssub.s32 %s18, 1
        // Predicated region
        $region49: #{tpu_custom_call.1} parent=47 // pred_check
          %p291 = pneg %p145
        $region50: #{tpu_custom_call.1} parent=47 // pred_check_branch
          %293 = sbr.rel (%p291) target = $region52
        $region51: #{tpu_custom_call.1} parent=47 // pred_region
          %294 = dma.done [#allocation5], 512
        $region52: #{tpu_custom_call.1} parent=47 // pred_fallthru
          _
        // Predicated region
        $region53: #{tpu_custom_call.1} parent=47 // pred_check
          %p295 = pneg %p166
        $region54: #{tpu_custom_call.1} parent=47 // pred_check_branch
          %297 = sbr.rel (%p295) target = $region56
        $region55: #{tpu_custom_call.1} parent=47 // pred_region
          %298 = dma.done [#allocation8], 512
        $region56: #{tpu_custom_call.1} parent=47 // pred_fallthru
          _
        %p299 = scmp.lt.s32.totalorder %s27, 1
        %s300 = scalar_select %p299, %s27, 1
        %s301 = smul.addr %s300, 8
        %s302 = scalar_lea.vmem %s0, %s301
        %p303 = pneg %p56
        %p304 = pneg %p53
        %p305 = scmp.lt.s32.totalorder %s27, 1
        %s306 = scalar_select %p305, %s27, 1
        %s307 = smul.addr %s306, 4
        %s308 = smul.addr %s307, 8
        %s309 = scalar_lea.vmem %s1, %s308
        %p310 = pneg %p82
        %p311 = pneg %p79
        %p312 = pneg %p103
        %p313 = pneg %p100
        %p314 = pneg %p124
        %p315 = pneg %p121
        %p316 = pneg %p145
        %p317 = pneg %p142
        %p318 = pneg %p166
        %p319 = pneg %p163
        %p320 = pneg %p187
        %p321 = pneg %p184
        %p322 = pneg %p215
        %p323 = pneg %p212
        %s324 = sand.u32 %s202, 1
        %s325 = scalar_lea.sflag [#allocation6], %s324
        %s326 = sand.u32 %s202, 1
        %s327 = smul.addr %s326, 8
        %s328 = scalar_lea.vmem [#allocation9], %s327
        %p329 = scmp.lt.s32.totalorder %s27, 1
        %s330 = scalar_select %p329, %s27, 1
        %s331 = smul.addr %s330, 8
        %s332 = scalar_lea.vmem %s0, %s331
        %p333 = scmp.lt.s32.totalorder %s27, 1
        %s334 = scalar_select %p333, %s27, 1
        %s335 = smul.addr %s334, 4
        %s336 = smul.addr %s335, 8
        %s337 = scalar_lea.vmem %s1, %s336
        %p338 = scmp.eq.s32.totalorder %s28, 0
        // Predicated region
        $region57: #{tpu_custom_call.1} parent=47 // pred_check
          %p339 = pneg %p338
        $region58: #{tpu_custom_call.1} parent=47 // pred_check_branch
          %341 = sbr.rel (%p339) target = $region60
        $region59: #{tpu_custom_call.1} parent=47 // pred_region
          %v342 = vld [vmem:[%s3] sm:$0xff]
          %v343 = vld [vmem:[%s3 + $0x8] sm:$0xff]
          %v344 = vld [vmem:[%s3 + $0x10] sm:$0xff]
          %v345 = vld [vmem:[%s3 + $0x18] sm:$0xff]
          %v346 = vld [vmem:[%s337] sm:$0xff]
          %v347 = vld [vmem:[%s337 + $0x8] sm:$0xff]
          %v348 = vld [vmem:[%s337 + $0x10] sm:$0xff]
          %v349 = vld [vmem:[%s337 + $0x18] sm:$0xff]
          %vm350 = vcmask 261120
          %v352 = vsel %vm350, %v342, 0
          %v355 = vsel %vm350, %v343, 0
          %v358 = vsel %vm350, %v344, 0
          %v361 = vsel %vm350, %v345, 0
          %363 = vmatprep.subr.mxu0 0.0
          %364 = vmatpush1.msra.mxu0 0.0
          %365 = vmatprep.subr.mxu0 0.0
          %366 = vmatpush1.msra.mxu0 0.0
          %367 = vmatprep.subr.mxu0 0.0
          %368 = vmatpush1.msra.mxu0 0.0
          %369 = vmatprep.subr.mxu0 0.0
          %370 = vmatpush1.msra.mxu0 0.0
          %371 = vmatprep.subr.mxu0 0.0
          %372 = vmatpush1.msra.mxu0 0.0
          %373 = vmatprep.subr.mxu0 0.0
          %374 = vmatpush1.msra.mxu0 0.0
          %375 = vmatprep.subr.mxu0 0.0
          %376 = vmatpush1.msra.mxu0 0.0
          %377 = vmatprep.subr.mxu0 0.0
          %378 = vmatpush1.msra.mxu0 0.0
          %379 = vmatprep.subr.mxu0 0.0
          %380 = vmatpush1.msra.mxu0 0.0
          %381 = vmatprep.subr.mxu0 0.0
          %382 = vmatpush1.msra.mxu0 0.0
          %383 = vmatprep.subr.mxu0 0.0
          %384 = vmatpush1.msra.mxu0 0.0
          %385 = vmatprep.subr.mxu0 0.0
          %386 = vmatpush1.msra.mxu0 0.0
          %387 = vmatprep.subr.mxu0 0.0
          %388 = vmatpush1.msra.mxu0 %v349
          %389 = vmatprep.subr.mxu0 0.0
          %390 = vmatpush1.msra.mxu0 %v348
          %391 = vmatprep.subr.mxu0 0.0
          %392 = vmatpush1.msra.mxu0 %v347
          %393 = vmatprep.subr.mxu0 0.0
          %394 = vmatpush1.msra.mxu0 %v346
          %395 = vmatprep.subr.mxu0 0.0
          %396 = vmatpush2.msra.mxu0 0.0
          %397 = vmatprep.subr.mxu0 0.0
          %398 = vmatpush2.msra.mxu0 0.0
          %399 = vmatprep.subr.mxu0 0.0
          %400 = vmatpush2.msra.mxu0 0.0
          %401 = vmatprep.subr.mxu0 0.0
          %402 = vmatpush2.msra.mxu0 0.0
          %403 = vmatprep.subr.mxu0 0.0
          %404 = vmatpush2.msra.mxu0 0.0
          %405 = vmatprep.subr.mxu0 0.0
          %406 = vmatpush2.msra.mxu0 0.0
          %407 = vmatprep.subr.mxu0 0.0
          %408 = vmatpush2.msra.mxu0 0.0
          %409 = vmatprep.subr.mxu0 0.0
          %410 = vmatpush2.msra.mxu0 0.0
          %411 = vmatprep.subr.mxu0 0.0
          %412 = vmatpush2.msra.mxu0 0.0
          %413 = vmatprep.subr.mxu0 0.0
          %414 = vmatpush2.msra.mxu0 0.0
          %415 = vmatprep.subr.mxu0 0.0
          %416 = vmatpush2.msra.mxu0 0.0
          %417 = vmatprep.subr.mxu0 0.0
          %418 = vmatpush2.msra.mxu0 0.0
          %419 = vmatprep.subr.mxu0 0.0
          %420 = vmatpush2.msra.mxu0 0.0
          %421 = vmatprep.subr.mxu0 0.0
          %422 = vmatpush2.msra.mxu0 0.0
          %423 = vmatprep.subr.mxu0 0.0
          %424 = vmatpush2.msra.mxu0 0.0
          %425 = vmatprep.subr.mxu0 0.0
          %426 = vmatpush2.msra.mxu0 0.0
          %427 = vmatprep.mubr.f32.mxu0 0.0
          %428 = vmatmul.mubr.f32.gmra.mxu0 %v352
          %v429 = vpop.f32.mrf.mxu0
          %v430 = vadd.f32 0.0, %v429
          %v431 = vpop.f32.mrf.mxu0
          %432 = vmatprep.mubr.f32.mxu0 0.0
          %433 = vmatmul.mubr.f32.gmra.mxu0 %v355
          %v434 = vpop.f32.mrf.mxu0
          %v435 = vadd.f32 0.0, %v434
          %v436 = vpop.f32.mrf.mxu0
          %437 = vmatprep.mubr.f32.mxu0 0.0
          %438 = vmatmul.mubr.f32.gmra.mxu0 %v358
          %v439 = vpop.f32.mrf.mxu0
          %v440 = vadd.f32 0.0, %v439
          %v441 = vpop.f32.mrf.mxu0
          %442 = vmatprep.mubr.f32.mxu0 0.0
          %443 = vmatmul.mubr.f32.gmra.mxu0 %v361
          %v444 = vpop.f32.mrf.mxu0
          %v445 = vadd.f32 0.0, %v444
          %v446 = vpop.f32.mrf.mxu0
          %447 = vdwg.mxu0
          %v448 = vld [vmem:[%s332] sm:$0xff]
          %v449 = vld [vmem:[#allocation4] sm:$0xff]
          %v450 = vld [vmem:[#allocation4 + $0x8] sm:$0xff]
          %v451 = vld [vmem:[#allocation4 + $0x10] sm:$0xff]
          %v452 = vld [vmem:[#allocation4 + $0x18] sm:$0xff]
          %v454 = vsel %vm350, %v448, 0
          %456 = vmatprep.subr.mxu0 0.0
          %457 = vmatpush1.msra.mxu0 0.0
          %458 = vmatprep.subr.mxu0 0.0
          %459 = vmatpush1.msra.mxu0 0.0
          %460 = vmatprep.subr.mxu0 0.0
          %461 = vmatpush1.msra.mxu0 0.0
          %462 = vmatprep.subr.mxu0 0.0
          %463 = vmatpush1.msra.mxu0 0.0
          %464 = vmatprep.subr.mxu0 0.0
          %465 = vmatpush1.msra.mxu0 0.0
          %466 = vmatprep.subr.mxu0 0.0
          %467 = vmatpush1.msra.mxu0 0.0
          %468 = vmatprep.subr.mxu0 0.0
          %469 = vmatpush1.msra.mxu0 0.0
          %470 = vmatprep.subr.mxu0 0.0
          %471 = vmatpush1.msra.mxu0 0.0
          %472 = vmatprep.subr.mxu0 0.0
          %473 = vmatpush1.msra.mxu0 0.0
          %474 = vmatprep.subr.mxu0 0.0
          %475 = vmatpush1.msra.mxu0 0.0
          %476 = vmatprep.subr.mxu0 0.0
          %477 = vmatpush1.msra.mxu0 0.0
          %478 = vmatprep.subr.mxu0 0.0
          %479 = vmatpush1.msra.mxu0 0.0
          %480 = vmatprep.subr.mxu0 0.0
          %481 = vmatpush1.msra.mxu0 %v452
          %482 = vmatprep.subr.mxu0 0.0
          %483 = vmatpush1.msra.mxu0 %v451
          %484 = vmatprep.subr.mxu0 0.0
          %485 = vmatpush1.msra.mxu0 %v450
          %486 = vmatprep.subr.mxu0 0.0
          %487 = vmatpush1.msra.mxu0 %v449
          %488 = vmatprep.subr.mxu0 0.0
          %489 = vmatpush2.msra.mxu0 0.0
          %490 = vmatprep.subr.mxu0 0.0
          %491 = vmatpush2.msra.mxu0 0.0
          %492 = vmatprep.subr.mxu0 0.0
          %493 = vmatpush2.msra.mxu0 0.0
          %494 = vmatprep.subr.mxu0 0.0
          %495 = vmatpush2.msra.mxu0 0.0
          %496 = vmatprep.subr.mxu0 0.0
          %497 = vmatpush2.msra.mxu0 0.0
          %498 = vmatprep.subr.mxu0 0.0
          %499 = vmatpush2.msra.mxu0 0.0
          %500 = vmatprep.subr.mxu0 0.0
          %501 = vmatpush2.msra.mxu0 0.0
          %502 = vmatprep.subr.mxu0 0.0
          %503 = vmatpush2.msra.mxu0 0.0
          %504 = vmatprep.subr.mxu0 0.0
          %505 = vmatpush2.msra.mxu0 0.0
          %506 = vmatprep.subr.mxu0 0.0
          %507 = vmatpush2.msra.mxu0 0.0
          %508 = vmatprep.subr.mxu0 0.0
          %509 = vmatpush2.msra.mxu0 0.0
          %510 = vmatprep.subr.mxu0 0.0
          %511 = vmatpush2.msra.mxu0 0.0
          %512 = vmatprep.subr.mxu0 0.0
          %513 = vmatpush2.msra.mxu0 0.0
          %514 = vmatprep.subr.mxu0 0.0
          %515 = vmatpush2.msra.mxu0 0.0
          %516 = vmatprep.subr.mxu0 0.0
          %517 = vmatpush2.msra.mxu0 0.0
          %518 = vmatprep.subr.mxu0 0.0
          %519 = vmatpush2.msra.mxu0 0.0
          %520 = vmatprep.mubr.f32.mxu0 0.0
          %521 = vmatmul.mubr.f32.gmra.mxu0 %v454
          %v522 = vpop.f32.mrf.mxu0
          %v523 = vadd.f32 0.0, %v522
          %v524 = vpop.f32.mrf.mxu0
          %525 = vdwg.mxu0
          %vm526 = vcmask 64512
          %527 = vst.msk [vmem:[#allocation2] sm:$0xff] %vm526, %v430
          %528 = vst.msk [vmem:[#allocation3] sm:$0xff] %vm526, %v523
          %s529 = scalar_lea.vmem [#allocation2], 8
          %530 = vst.msk [vmem:[%s529] sm:$0xff] %vm526, %v435
          %532 = vrot.lane.b32.xlu0 %v523, 120
          %v533 = vpop.permute.xlu0 %532
          %s535 = scalar_lea.vmem [#allocation3], 8
          %536 = vst.msk [vmem:[%s535] sm:$0xff] %vm526, %v533
          %s537 = scalar_lea.vmem [#allocation2], 16
          %538 = vst.msk [vmem:[%s537] sm:$0xff] %vm526, %v440
          %539 = vrot.lane.b32.xlu0 %v523, 112
          %v540 = vpop.permute.xlu0 %539
          %s542 = scalar_lea.vmem [#allocation3], 16
          %543 = vst.msk [vmem:[%s542] sm:$0xff] %vm526, %v540
          %s544 = scalar_lea.vmem [#allocation2], 24
          %545 = vst.msk [vmem:[%s544] sm:$0xff] %vm526, %v445
          %546 = vrot.lane.b32.xlu0 %v523, 104
          %v547 = vpop.permute.xlu0 %546
          %s549 = scalar_lea.vmem [#allocation3], 24
          %550 = vst.msk [vmem:[%s549] sm:$0xff] %vm526, %v547
        $region60: #{tpu_custom_call.1} parent=47 // pred_fallthru
          _
        %s551 = smul.u32 %s28, 8
        %s552 = scalar_lea.vmem %s332, %s551
        %v553 = vld [vmem:[%s552] sm:$0xff]
        %v554 = vld [vmem:[%s2] sm:$0xff]
        %v555 = vld [vmem:[%s2 + $0x8] sm:$0xff]
        %v556 = vld [vmem:[%s2 + $0x10] sm:$0xff]
        %v557 = vld [vmem:[%s2 + $0x18] sm:$0xff]
        %vm558 = vcmask 261120
        %v560 = vsel %vm558, %v553, 0
        %562 = vmatprep.subr.mxu0 0.0
        %563 = vmatpush1.msra.mxu0 0.0
        %564 = vmatprep.subr.mxu0 0.0
        %565 = vmatpush1.msra.mxu0 0.0
        %566 = vmatprep.subr.mxu0 0.0
        %567 = vmatpush1.msra.mxu0 0.0
        %568 = vmatprep.subr.mxu0 0.0
        %569 = vmatpush1.msra.mxu0 0.0
        %570 = vmatprep.subr.mxu0 0.0
        %571 = vmatpush1.msra.mxu0 0.0
        %572 = vmatprep.subr.mxu0 0.0
        %573 = vmatpush1.msra.mxu0 0.0
        %574 = vmatprep.subr.mxu0 0.0
        %575 = vmatpush1.msra.mxu0 0.0
        %576 = vmatprep.subr.mxu0 0.0
        %577 = vmatpush1.msra.mxu0 0.0
        %578 = vmatprep.subr.mxu0 0.0
        %579 = vmatpush1.msra.mxu0 0.0
        %580 = vmatprep.subr.mxu0 0.0
        %581 = vmatpush1.msra.mxu0 0.0
        %582 = vmatprep.subr.mxu0 0.0
        %583 = vmatpush1.msra.mxu0 0.0
        %584 = vmatprep.subr.mxu0 0.0
        %585 = vmatpush1.msra.mxu0 0.0
        %586 = vmatprep.subr.mxu0 0.0
        %587 = vmatpush1.msra.mxu0 %v557
        %588 = vmatprep.subr.mxu0 0.0
        %589 = vmatpush1.msra.mxu0 %v556
        %590 = vmatprep.subr.mxu0 0.0
        %591 = vmatpush1.msra.mxu0 %v555
        %592 = vmatprep.subr.mxu0 0.0
        %593 = vmatpush1.msra.mxu0 %v554
        %594 = vmatprep.subr.mxu0 0.0
        %595 = vmatpush2.msra.mxu0 0.0
        %596 = vmatprep.subr.mxu0 0.0
        %597 = vmatpush2.msra.mxu0 0.0
        %598 = vmatprep.subr.mxu0 0.0
        %599 = vmatpush2.msra.mxu0 0.0
        %600 = vmatprep.subr.mxu0 0.0
        %601 = vmatpush2.msra.mxu0 0.0
        %602 = vmatprep.subr.mxu0 0.0
        %603 = vmatpush2.msra.mxu0 0.0
        %604 = vmatprep.subr.mxu0 0.0
        %605 = vmatpush2.msra.mxu0 0.0
        %606 = vmatprep.subr.mxu0 0.0
        %607 = vmatpush2.msra.mxu0 0.0
        %608 = vmatprep.subr.mxu0 0.0
        %609 = vmatpush2.msra.mxu0 0.0
        %610 = vmatprep.subr.mxu0 0.0
        %611 = vmatpush2.msra.mxu0 0.0
        %612 = vmatprep.subr.mxu0 0.0
        %613 = vmatpush2.msra.mxu0 0.0
        %614 = vmatprep.subr.mxu0 0.0
        %615 = vmatpush2.msra.mxu0 0.0
        %616 = vmatprep.subr.mxu0 0.0
        %617 = vmatpush2.msra.mxu0 0.0
        %618 = vmatprep.subr.mxu0 0.0
        %619 = vmatpush2.msra.mxu0 0.0
        %620 = vmatprep.subr.mxu0 0.0
        %621 = vmatpush2.msra.mxu0 0.0
        %622 = vmatprep.subr.mxu0 0.0
        %623 = vmatpush2.msra.mxu0 0.0
        %624 = vmatprep.subr.mxu0 0.0
        %625 = vmatpush2.msra.mxu0 0.0
        %626 = vmatprep.mubr.f32.mxu0 0.0
        %627 = vmatmul.mubr.f32.gmra.mxu0 %v560
        %v628 = vpop.f32.mrf.mxu0
        %v629 = vadd.f32 0.0, %v628
        %v630 = vpop.f32.mrf.mxu0
        %631 = vdwg.mxu0
        %v632 = vld [vmem:[#allocation2] sm:$0xff]
        %vm633 = vcmask 64512
        %v635 = vsel %vm633, %v629, 0
        %637 = vmatprep.subr.mxu0 0.0
        %638 = vmatpush1.msra.mxu0 0.0
        %639 = vmatprep.subr.mxu0 0.0
        %640 = vmatpush1.msra.mxu0 0.0
        %641 = vmatprep.subr.mxu0 0.0
        %642 = vmatpush1.msra.mxu0 0.0
        %643 = vmatprep.subr.mxu0 0.0
        %644 = vmatpush1.msra.mxu0 0.0
        %645 = vmatprep.subr.mxu0 0.0
        %646 = vmatpush1.msra.mxu0 0.0
        %647 = vmatprep.subr.mxu0 0.0
        %648 = vmatpush1.msra.mxu0 0.0
        %649 = vmatprep.subr.mxu0 0.0
        %650 = vmatpush1.msra.mxu0 0.0
        %651 = vmatprep.subr.mxu0 0.0
        %652 = vmatpush1.msra.mxu0 0.0
        %653 = vmatprep.subr.mxu0 0.0
        %654 = vmatpush1.msra.mxu0 0.0
        %655 = vmatprep.subr.mxu0 0.0
        %656 = vmatpush1.msra.mxu0 0.0
        %657 = vmatprep.subr.mxu0 0.0
        %658 = vmatpush1.msra.mxu0 0.0
        %659 = vmatprep.subr.mxu0 0.0
        %660 = vmatpush1.msra.mxu0 0.0
        %661 = vmatprep.subr.mxu0 0.0
        %662 = vmatpush1.msra.mxu0 0.0
        %663 = vmatprep.subr.mxu0 0.0
        %664 = vmatpush1.msra.mxu0 0.0
        %665 = vmatprep.subr.mxu0 0.0
        %666 = vmatpush1.msra.mxu0 0.0
        %667 = vmatprep.subr.mxu0 0.0
        %668 = vmatpush1.msra.mxu0 %v632
        %669 = vmatprep.subr.mxu0 0.0
        %670 = vmatpush2.msra.mxu0 0.0
        %671 = vmatprep.subr.mxu0 0.0
        %672 = vmatpush2.msra.mxu0 0.0
        %673 = vmatprep.subr.mxu0 0.0
        %674 = vmatpush2.msra.mxu0 0.0
        %675 = vmatprep.subr.mxu0 0.0
        %676 = vmatpush2.msra.mxu0 0.0
        %677 = vmatprep.subr.mxu0 0.0
        %678 = vmatpush2.msra.mxu0 0.0
        %679 = vmatprep.subr.mxu0 0.0
        %680 = vmatpush2.msra.mxu0 0.0
        %681 = vmatprep.subr.mxu0 0.0
        %682 = vmatpush2.msra.mxu0 0.0
        %683 = vmatprep.subr.mxu0 0.0
        %684 = vmatpush2.msra.mxu0 0.0
        %685 = vmatprep.subr.mxu0 0.0
        %686 = vmatpush2.msra.mxu0 0.0
        %687 = vmatprep.subr.mxu0 0.0
        %688 = vmatpush2.msra.mxu0 0.0
        %689 = vmatprep.subr.mxu0 0.0
        %690 = vmatpush2.msra.mxu0 0.0
        %691 = vmatprep.subr.mxu0 0.0
        %692 = vmatpush2.msra.mxu0 0.0
        %693 = vmatprep.subr.mxu0 0.0
        %694 = vmatpush2.msra.mxu0 0.0
        %695 = vmatprep.subr.mxu0 0.0
        %696 = vmatpush2.msra.mxu0 0.0
        %697 = vmatprep.subr.mxu0 0.0
        %698 = vmatpush2.msra.mxu0 0.0
        %699 = vmatprep.subr.mxu0 0.0
        %700 = vmatpush2.msra.mxu0 0.0
        %701 = vmatprep.mubr.f32.mxu0 0.0
        %702 = vmatmul.mubr.f32.gmra.mxu0 %v635
        %v703 = vpop.f32.mrf.mxu0
        %v704 = vadd.f32 0.0, %v703
        %v705 = vpop.f32.mrf.mxu0
        %706 = vdwg.mxu0
        %v707 = vsel %vm633, %v704, -inf
        %708 = vmax.xlane.f32.xlu0 %v707
        %v709 = vpop.xlane.xlu0 %708
        %v710 = vmax.f32 %v709, -1e+30
        %v711 = vsub.f32 -1e+30, %v710
        %v712 = vmul.f32 %v711, 1.442695
        %v713 = vpow.pop %v712
        %v714 = vsub.f32 %v704, %v710
        %v715 = vmul.f32 %v714, 1.442695
        %v716 = vpow.pop %v715
        %v717 = vmul.f32 %v713, 0.0
        %v718 = vsel %vm633, %v716, 0.0
        %719 = vadd.xlane.f32.xlu0 %v718
        %v720 = vpop.xlane.xlu0 %719
        %v721 = vadd.f32 %v717, %v720
        %v722 = vld [vmem:[#allocation3] sm:$0xff]
        %v724 = vsel %vm633, %v716, 0
        %726 = vmatprep.subr.mxu0 0.0
        %727 = vmatpush1.msra.mxu0 0.0
        %728 = vmatprep.subr.mxu0 0.0
        %729 = vmatpush1.msra.mxu0 0.0
        %730 = vmatprep.subr.mxu0 0.0
        %731 = vmatpush1.msra.mxu0 0.0
        %732 = vmatprep.subr.mxu0 0.0
        %733 = vmatpush1.msra.mxu0 0.0
        %734 = vmatprep.subr.mxu0 0.0
        %735 = vmatpush1.msra.mxu0 0.0
        %736 = vmatprep.subr.mxu0 0.0
        %737 = vmatpush1.msra.mxu0 0.0
        %738 = vmatprep.subr.mxu0 0.0
        %739 = vmatpush1.msra.mxu0 0.0
        %740 = vmatprep.subr.mxu0 0.0
        %741 = vmatpush1.msra.mxu0 0.0
        %742 = vmatprep.subr.mxu0 0.0
        %743 = vmatpush1.msra.mxu0 0.0
        %744 = vmatprep.subr.mxu0 0.0
        %745 = vmatpush1.msra.mxu0 0.0
        %746 = vmatprep.subr.mxu0 0.0
        %747 = vmatpush1.msra.mxu0 0.0
        %748 = vmatprep.subr.mxu0 0.0
        %749 = vmatpush1.msra.mxu0 0.0
        %750 = vmatprep.subr.mxu0 0.0
        %751 = vmatpush1.msra.mxu0 0.0
        %752 = vmatprep.subr.mxu0 0.0
        %753 = vmatpush1.msra.mxu0 0.0
        %754 = vmatprep.subr.mxu0 0.0
        %755 = vmatpush1.msra.mxu0 0.0
        %756 = vmatprep.subr.mxu0 0.0
        %757 = vmatpush1.msra.mxu0 %v722
        %758 = vmatprep.subr.mxu0 0.0
        %759 = vmatpush2.msra.mxu0 0.0
        %760 = vmatprep.subr.mxu0 0.0
        %761 = vmatpush2.msra.mxu0 0.0
        %762 = vmatprep.subr.mxu0 0.0
        %763 = vmatpush2.msra.mxu0 0.0
        %764 = vmatprep.subr.mxu0 0.0
        %765 = vmatpush2.msra.mxu0 0.0
        %766 = vmatprep.subr.mxu0 0.0
        %767 = vmatpush2.msra.mxu0 0.0
        %768 = vmatprep.subr.mxu0 0.0
        %769 = vmatpush2.msra.mxu0 0.0
        %770 = vmatprep.subr.mxu0 0.0
        %771 = vmatpush2.msra.mxu0 0.0
        %772 = vmatprep.subr.mxu0 0.0
        %773 = vmatpush2.msra.mxu0 0.0
        %774 = vmatprep.subr.mxu0 0.0
        %775 = vmatpush2.msra.mxu0 0.0
        %776 = vmatprep.subr.mxu0 0.0
        %777 = vmatpush2.msra.mxu0 0.0
        %778 = vmatprep.subr.mxu0 0.0
        %779 = vmatpush2.msra.mxu0 0.0
        %780 = vmatprep.subr.mxu0 0.0
        %781 = vmatpush2.msra.mxu0 0.0
        %782 = vmatprep.subr.mxu0 0.0
        %783 = vmatpush2.msra.mxu0 0.0
        %784 = vmatprep.subr.mxu0 0.0
        %785 = vmatpush2.msra.mxu0 0.0
        %786 = vmatprep.subr.mxu0 0.0
        %787 = vmatpush2.msra.mxu0 0.0
        %788 = vmatprep.subr.mxu0 0.0
        %789 = vmatpush2.msra.mxu0 0.0
        %790 = vmatprep.mubr.f32.mxu0 0.0
        %791 = vmatmul.mubr.f32.gmra.mxu0 %v724
        %v792 = vpop.f32.mrf.mxu0
        %v793 = vadd.f32 0.0, %v792
        %v794 = vpop.f32.mrf.mxu0
        %795 = vdwg.mxu0
        %v796 = vadd.f32 %v717, %v793
        %v797 = vrcp.pop %v721
        %v798 = vmul.f32 %v796, %v797
        %s799 = scalar_lea.vmem [#allocation2], 8
        %v800 = vld [vmem:[%s799] sm:$0xff]
        %801 = vrot.lane.b32.xlu0 %v629, 120
        %v802 = vpop.permute.xlu0 %801
        %v803 = vsel %vm633, %v802, 0
        %805 = vmatprep.subr.mxu0 0.0
        %806 = vmatpush1.msra.mxu0 0.0
        %807 = vmatprep.subr.mxu0 0.0
        %808 = vmatpush1.msra.mxu0 0.0
        %809 = vmatprep.subr.mxu0 0.0
        %810 = vmatpush1.msra.mxu0 0.0
        %811 = vmatprep.subr.mxu0 0.0
        %812 = vmatpush1.msra.mxu0 0.0
        %813 = vmatprep.subr.mxu0 0.0
        %814 = vmatpush1.msra.mxu0 0.0
        %815 = vmatprep.subr.mxu0 0.0
        %816 = vmatpush1.msra.mxu0 0.0
        %817 = vmatprep.subr.mxu0 0.0
        %818 = vmatpush1.msra.mxu0 0.0
        %819 = vmatprep.subr.mxu0 0.0
        %820 = vmatpush1.msra.mxu0 0.0
        %821 = vmatprep.subr.mxu0 0.0
        %822 = vmatpush1.msra.mxu0 0.0
        %823 = vmatprep.subr.mxu0 0.0
        %824 = vmatpush1.msra.mxu0 0.0
        %825 = vmatprep.subr.mxu0 0.0
        %826 = vmatpush1.msra.mxu0 0.0
        %827 = vmatprep.subr.mxu0 0.0
        %828 = vmatpush1.msra.mxu0 0.0
        %829 = vmatprep.subr.mxu0 0.0
        %830 = vmatpush1.msra.mxu0 0.0
        %831 = vmatprep.subr.mxu0 0.0
        %832 = vmatpush1.msra.mxu0 0.0
        %833 = vmatprep.subr.mxu0 0.0
        %834 = vmatpush1.msra.mxu0 0.0
        %835 = vmatprep.subr.mxu0 0.0
        %836 = vmatpush1.msra.mxu0 %v800
        %837 = vmatprep.subr.mxu0 0.0
        %838 = vmatpush2.msra.mxu0 0.0
        %839 = vmatprep.subr.mxu0 0.0
        %840 = vmatpush2.msra.mxu0 0.0
        %841 = vmatprep.subr.mxu0 0.0
        %842 = vmatpush2.msra.mxu0 0.0
        %843 = vmatprep.subr.mxu0 0.0
        %844 = vmatpush2.msra.mxu0 0.0
        %845 = vmatprep.subr.mxu0 0.0
        %846 = vmatpush2.msra.mxu0 0.0
        %847 = vmatprep.subr.mxu0 0.0
        %848 = vmatpush2.msra.mxu0 0.0
        %849 = vmatprep.subr.mxu0 0.0
        %850 = vmatpush2.msra.mxu0 0.0
        %851 = vmatprep.subr.mxu0 0.0
        %852 = vmatpush2.msra.mxu0 0.0
        %853 = vmatprep.subr.mxu0 0.0
        %854 = vmatpush2.msra.mxu0 0.0
        %855 = vmatprep.subr.mxu0 0.0
        %856 = vmatpush2.msra.mxu0 0.0
        %857 = vmatprep.subr.mxu0 0.0
        %858 = vmatpush2.msra.mxu0 0.0
        %859 = vmatprep.subr.mxu0 0.0
        %860 = vmatpush2.msra.mxu0 0.0
        %861 = vmatprep.subr.mxu0 0.0
        %862 = vmatpush2.msra.mxu0 0.0
        %863 = vmatprep.subr.mxu0 0.0
        %864 = vmatpush2.msra.mxu0 0.0
        %865 = vmatprep.subr.mxu0 0.0
        %866 = vmatpush2.msra.mxu0 0.0
        %867 = vmatprep.subr.mxu0 0.0
        %868 = vmatpush2.msra.mxu0 0.0
        %869 = vmatprep.mubr.f32.mxu0 0.0
        %870 = vmatmul.mubr.f32.gmra.mxu0 %v803
        %v871 = vpop.f32.mrf.mxu0
        %v872 = vadd.f32 0.0, %v871
        %v873 = vpop.f32.mrf.mxu0
        %874 = vdwg.mxu0
        %v875 = vsel %vm633, %v872, -inf
        %876 = vmax.xlane.f32.xlu0 %v875
        %v877 = vpop.xlane.xlu0 %876
        %v878 = vmax.f32 %v877, -1e+30
        %v879 = vsub.f32 -1e+30, %v878
        %v880 = vmul.f32 %v879, 1.442695
        %v881 = vpow.pop %v880
        %v882 = vsub.f32 %v872, %v878
        %v883 = vmul.f32 %v882, 1.442695
        %v884 = vpow.pop %v883
        %v885 = vmul.f32 %v881, 0.0
        %v886 = vsel %vm633, %v884, 0.0
        %887 = vadd.xlane.f32.xlu0 %v886
        %v888 = vpop.xlane.xlu0 %887
        %v889 = vadd.f32 %v885, %v888
        %s890 = scalar_lea.vmem [#allocation3], 8
        %v891 = vld [vmem:[%s890] sm:$0xff]
        %v893 = vsel %vm633, %v884, 0
        %895 = vmatprep.subr.mxu0 0.0
        %896 = vmatpush1.msra.mxu0 0.0
        %897 = vmatprep.subr.mxu0 0.0
        %898 = vmatpush1.msra.mxu0 0.0
        %899 = vmatprep.subr.mxu0 0.0
        %900 = vmatpush1.msra.mxu0 0.0
        %901 = vmatprep.subr.mxu0 0.0
        %902 = vmatpush1.msra.mxu0 0.0
        %903 = vmatprep.subr.mxu0 0.0
        %904 = vmatpush1.msra.mxu0 0.0
        %905 = vmatprep.subr.mxu0 0.0
        %906 = vmatpush1.msra.mxu0 0.0
        %907 = vmatprep.subr.mxu0 0.0
        %908 = vmatpush1.msra.mxu0 0.0
        %909 = vmatprep.subr.mxu0 0.0
        %910 = vmatpush1.msra.mxu0 0.0
        %911 = vmatprep.subr.mxu0 0.0
        %912 = vmatpush1.msra.mxu0 0.0
        %913 = vmatprep.subr.mxu0 0.0
        %914 = vmatpush1.msra.mxu0 0.0
        %915 = vmatprep.subr.mxu0 0.0
        %916 = vmatpush1.msra.mxu0 0.0
        %917 = vmatprep.subr.mxu0 0.0
        %918 = vmatpush1.msra.mxu0 0.0
        %919 = vmatprep.subr.mxu0 0.0
        %920 = vmatpush1.msra.mxu0 0.0
        %921 = vmatprep.subr.mxu0 0.0
        %922 = vmatpush1.msra.mxu0 0.0
        %923 = vmatprep.subr.mxu0 0.0
        %924 = vmatpush1.msra.mxu0 0.0
        %925 = vmatprep.subr.mxu0 0.0
        %926 = vmatpush1.msra.mxu0 %v891
        %927 = vmatprep.subr.mxu0 0.0
        %928 = vmatpush2.msra.mxu0 0.0
        %929 = vmatprep.subr.mxu0 0.0
        %930 = vmatpush2.msra.mxu0 0.0
        %931 = vmatprep.subr.mxu0 0.0
        %932 = vmatpush2.msra.mxu0 0.0
        %933 = vmatprep.subr.mxu0 0.0
        %934 = vmatpush2.msra.mxu0 0.0
        %935 = vmatprep.subr.mxu0 0.0
        %936 = vmatpush2.msra.mxu0 0.0
        %937 = vmatprep.subr.mxu0 0.0
        %938 = vmatpush2.msra.mxu0 0.0
        %939 = vmatprep.subr.mxu0 0.0
        %940 = vmatpush2.msra.mxu0 0.0
        %941 = vmatprep.subr.mxu0 0.0
        %942 = vmatpush2.msra.mxu0 0.0
        %943 = vmatprep.subr.mxu0 0.0
        %944 = vmatpush2.msra.mxu0 0.0
        %945 = vmatprep.subr.mxu0 0.0
        %946 = vmatpush2.msra.mxu0 0.0
        %947 = vmatprep.subr.mxu0 0.0
        %948 = vmatpush2.msra.mxu0 0.0
        %949 = vmatprep.subr.mxu0 0.0
        %950 = vmatpush2.msra.mxu0 0.0
        %951 = vmatprep.subr.mxu0 0.0
        %952 = vmatpush2.msra.mxu0 0.0
        %953 = vmatprep.subr.mxu0 0.0
        %954 = vmatpush2.msra.mxu0 0.0
        %955 = vmatprep.subr.mxu0 0.0
        %956 = vmatpush2.msra.mxu0 0.0
        %957 = vmatprep.subr.mxu0 0.0
        %958 = vmatpush2.msra.mxu0 0.0
        %959 = vmatprep.mubr.f32.mxu0 0.0
        %960 = vmatmul.mubr.f32.gmra.mxu0 %v893
        %v961 = vpop.f32.mrf.mxu0
        %v962 = vadd.f32 0.0, %v961
        %v963 = vpop.f32.mrf.mxu0
        %964 = vdwg.mxu0
        %v965 = vadd.f32 %v885, %v962
        %v966 = vrcp.pop %v889
        %v967 = vmul.f32 %v965, %v966
        %s968 = scalar_lea.vmem [#allocation2], 16
        %v969 = vld [vmem:[%s968] sm:$0xff]
        %970 = vrot.lane.b32.xlu0 %v629, 112
        %v971 = vpop.permute.xlu0 %970
        %v972 = vsel %vm633, %v971, 0
        %974 = vmatprep.subr.mxu0 0.0
        %975 = vmatpush1.msra.mxu0 0.0
        %976 = vmatprep.subr.mxu0 0.0
        %977 = vmatpush1.msra.mxu0 0.0
        %978 = vmatprep.subr.mxu0 0.0
        %979 = vmatpush1.msra.mxu0 0.0
        %980 = vmatprep.subr.mxu0 0.0
        %981 = vmatpush1.msra.mxu0 0.0
        %982 = vmatprep.subr.mxu0 0.0
        %983 = vmatpush1.msra.mxu0 0.0
        %984 = vmatprep.subr.mxu0 0.0
        %985 = vmatpush1.msra.mxu0 0.0
        %986 = vmatprep.subr.mxu0 0.0
        %987 = vmatpush1.msra.mxu0 0.0
        %988 = vmatprep.subr.mxu0 0.0
        %989 = vmatpush1.msra.mxu0 0.0
        %990 = vmatprep.subr.mxu0 0.0
        %991 = vmatpush1.msra.mxu0 0.0
        %992 = vmatprep.subr.mxu0 0.0
        %993 = vmatpush1.msra.mxu0 0.0
        %994 = vmatprep.subr.mxu0 0.0
        %995 = vmatpush1.msra.mxu0 0.0
        %996 = vmatprep.subr.mxu0 0.0
        %997 = vmatpush1.msra.mxu0 0.0
        %998 = vmatprep.subr.mxu0 0.0
        %999 = vmatpush1.msra.mxu0 0.0
        %1000 = vmatprep.subr.mxu0 0.0
        %1001 = vmatpush1.msra.mxu0 0.0
        %1002 = vmatprep.subr.mxu0 0.0
        %1003 = vmatpush1.msra.mxu0 0.0
        %1004 = vmatprep.subr.mxu0 0.0
        %1005 = vmatpush1.msra.mxu0 %v969
        %1006 = vmatprep.subr.mxu0 0.0
        %1007 = vmatpush2.msra.mxu0 0.0
        %1008 = vmatprep.subr.mxu0 0.0
        %1009 = vmatpush2.msra.mxu0 0.0
        %1010 = vmatprep.subr.mxu0 0.0
        %1011 = vmatpush2.msra.mxu0 0.0
        %1012 = vmatprep.subr.mxu0 0.0
        %1013 = vmatpush2.msra.mxu0 0.0
        %1014 = vmatprep.subr.mxu0 0.0
        %1015 = vmatpush2.msra.mxu0 0.0
        %1016 = vmatprep.subr.mxu0 0.0
        %1017 = vmatpush2.msra.mxu0 0.0
        %1018 = vmatprep.subr.mxu0 0.0
        %1019 = vmatpush2.msra.mxu0 0.0
        %1020 = vmatprep.subr.mxu0 0.0
        %1021 = vmatpush2.msra.mxu0 0.0
        %1022 = vmatprep.subr.mxu0 0.0
        %1023 = vmatpush2.msra.mxu0 0.0
        %1024 = vmatprep.subr.mxu0 0.0
        %1025 = vmatpush2.msra.mxu0 0.0
        %1026 = vmatprep.subr.mxu0 0.0
        %1027 = vmatpush2.msra.mxu0 0.0
        %1028 = vmatprep.subr.mxu0 0.0
        %1029 = vmatpush2.msra.mxu0 0.0
        %1030 = vmatprep.subr.mxu0 0.0
        %1031 = vmatpush2.msra.mxu0 0.0
        %1032 = vmatprep.subr.mxu0 0.0
        %1033 = vmatpush2.msra.mxu0 0.0
        %1034 = vmatprep.subr.mxu0 0.0
        %1035 = vmatpush2.msra.mxu0 0.0
        %1036 = vmatprep.subr.mxu0 0.0
        %1037 = vmatpush2.msra.mxu0 0.0
        %1038 = vmatprep.mubr.f32.mxu0 0.0
        %1039 = vmatmul.mubr.f32.gmra.mxu0 %v972
        %v1040 = vpop.f32.mrf.mxu0
        %v1041 = vadd.f32 0.0, %v1040
        %v1042 = vpop.f32.mrf.mxu0
        %1043 = vdwg.mxu0
        %v1044 = vsel %vm633, %v1041, -inf
        %1045 = vmax.xlane.f32.xlu0 %v1044
        %v1046 = vpop.xlane.xlu0 %1045
        %v1047 = vmax.f32 %v1046, -1e+30
        %v1048 = vsub.f32 -1e+30, %v1047
        %v1049 = vmul.f32 %v1048, 1.442695
        %v1050 = vpow.pop %v1049
        %v1051 = vsub.f32 %v1041, %v1047
        %v1052 = vmul.f32 %v1051, 1.442695
        %v1053 = vpow.pop %v1052
        %v1054 = vmul.f32 %v1050, 0.0
        %v1055 = vsel %vm633, %v1053, 0.0
        %1056 = vadd.xlane.f32.xlu0 %v1055
        %v1057 = vpop.xlane.xlu0 %1056
        %v1058 = vadd.f32 %v1054, %v1057
        %s1059 = scalar_lea.vmem [#allocation3], 16
        %v1060 = vld [vmem:[%s1059] sm:$0xff]
        %v1062 = vsel %vm633, %v1053, 0
        %1064 = vmatprep.subr.mxu0 0.0
        %1065 = vmatpush1.msra.mxu0 0.0
        %1066 = vmatprep.subr.mxu0 0.0
        %1067 = vmatpush1.msra.mxu0 0.0
        %1068 = vmatprep.subr.mxu0 0.0
        %1069 = vmatpush1.msra.mxu0 0.0
        %1070 = vmatprep.subr.mxu0 0.0
        %1071 = vmatpush1.msra.mxu0 0.0
        %1072 = vmatprep.subr.mxu0 0.0
        %1073 = vmatpush1.msra.mxu0 0.0
        %1074 = vmatprep.subr.mxu0 0.0
        %1075 = vmatpush1.msra.mxu0 0.0
        %1076 = vmatprep.subr.mxu0 0.0
        %1077 = vmatpush1.msra.mxu0 0.0
        %1078 = vmatprep.subr.mxu0 0.0
        %1079 = vmatpush1.msra.mxu0 0.0
        %1080 = vmatprep.subr.mxu0 0.0
        %1081 = vmatpush1.msra.mxu0 0.0
        %1082 = vmatprep.subr.mxu0 0.0
        %1083 = vmatpush1.msra.mxu0 0.0
        %1084 = vmatprep.subr.mxu0 0.0
        %1085 = vmatpush1.msra.mxu0 0.0
        %1086 = vmatprep.subr.mxu0 0.0
        %1087 = vmatpush1.msra.mxu0 0.0
        %1088 = vmatprep.subr.mxu0 0.0
        %1089 = vmatpush1.msra.mxu0 0.0
        %1090 = vmatprep.subr.mxu0 0.0
        %1091 = vmatpush1.msra.mxu0 0.0
        %1092 = vmatprep.subr.mxu0 0.0
        %1093 = vmatpush1.msra.mxu0 0.0
        %1094 = vmatprep.subr.mxu0 0.0
        %1095 = vmatpush1.msra.mxu0 %v1060
        %1096 = vmatprep.subr.mxu0 0.0
        %1097 = vmatpush2.msra.mxu0 0.0
        %1098 = vmatprep.subr.mxu0 0.0
        %1099 = vmatpush2.msra.mxu0 0.0
        %1100 = vmatprep.subr.mxu0 0.0
        %1101 = vmatpush2.msra.mxu0 0.0
        %1102 = vmatprep.subr.mxu0 0.0
        %1103 = vmatpush2.msra.mxu0 0.0
        %1104 = vmatprep.subr.mxu0 0.0
        %1105 = vmatpush2.msra.mxu0 0.0
        %1106 = vmatprep.subr.mxu0 0.0
        %1107 = vmatpush2.msra.mxu0 0.0
        %1108 = vmatprep.subr.mxu0 0.0
        %1109 = vmatpush2.msra.mxu0 0.0
        %1110 = vmatprep.subr.mxu0 0.0
        %1111 = vmatpush2.msra.mxu0 0.0
        %1112 = vmatprep.subr.mxu0 0.0
        %1113 = vmatpush2.msra.mxu0 0.0
        %1114 = vmatprep.subr.mxu0 0.0
        %1115 = vmatpush2.msra.mxu0 0.0
        %1116 = vmatprep.subr.mxu0 0.0
        %1117 = vmatpush2.msra.mxu0 0.0
        %1118 = vmatprep.subr.mxu0 0.0
        %1119 = vmatpush2.msra.mxu0 0.0
        %1120 = vmatprep.subr.mxu0 0.0
        %1121 = vmatpush2.msra.mxu0 0.0
        %1122 = vmatprep.subr.mxu0 0.0
        %1123 = vmatpush2.msra.mxu0 0.0
        %1124 = vmatprep.subr.mxu0 0.0
        %1125 = vmatpush2.msra.mxu0 0.0
        %1126 = vmatprep.subr.mxu0 0.0
        %1127 = vmatpush2.msra.mxu0 0.0
        %1128 = vmatprep.mubr.f32.mxu0 0.0
        %1129 = vmatmul.mubr.f32.gmra.mxu0 %v1062
        %v1130 = vpop.f32.mrf.mxu0
        %v1131 = vadd.f32 0.0, %v1130
        %v1132 = vpop.f32.mrf.mxu0
        %1133 = vdwg.mxu0
        %v1134 = vadd.f32 %v1054, %v1131
        %v1135 = vrcp.pop %v1058
        %v1136 = vmul.f32 %v1134, %v1135
        %s1137 = scalar_lea.vmem [#allocation2], 24
        %v1138 = vld [vmem:[%s1137] sm:$0xff]
        %1139 = vrot.lane.b32.xlu0 %v629, 104
        %v1140 = vpop.permute.xlu0 %1139
        %v1141 = vsel %vm633, %v1140, 0
        %1143 = vmatprep.subr.mxu0 0.0
        %1144 = vmatpush1.msra.mxu0 0.0
        %1145 = vmatprep.subr.mxu0 0.0
        %1146 = vmatpush1.msra.mxu0 0.0
        %1147 = vmatprep.subr.mxu0 0.0
        %1148 = vmatpush1.msra.mxu0 0.0
        %1149 = vmatprep.subr.mxu0 0.0
        %1150 = vmatpush1.msra.mxu0 0.0
        %1151 = vmatprep.subr.mxu0 0.0
        %1152 = vmatpush1.msra.mxu0 0.0
        %1153 = vmatprep.subr.mxu0 0.0
        %1154 = vmatpush1.msra.mxu0 0.0
        %1155 = vmatprep.subr.mxu0 0.0
        %1156 = vmatpush1.msra.mxu0 0.0
        %1157 = vmatprep.subr.mxu0 0.0
        %1158 = vmatpush1.msra.mxu0 0.0
        %1159 = vmatprep.subr.mxu0 0.0
        %1160 = vmatpush1.msra.mxu0 0.0
        %1161 = vmatprep.subr.mxu0 0.0
        %1162 = vmatpush1.msra.mxu0 0.0
        %1163 = vmatprep.subr.mxu0 0.0
        %1164 = vmatpush1.msra.mxu0 0.0
        %1165 = vmatprep.subr.mxu0 0.0
        %1166 = vmatpush1.msra.mxu0 0.0
        %1167 = vmatprep.subr.mxu0 0.0
        %1168 = vmatpush1.msra.mxu0 0.0
        %1169 = vmatprep.subr.mxu0 0.0
        %1170 = vmatpush1.msra.mxu0 0.0
        %1171 = vmatprep.subr.mxu0 0.0
        %1172 = vmatpush1.msra.mxu0 0.0
        %1173 = vmatprep.subr.mxu0 0.0
        %1174 = vmatpush1.msra.mxu0 %v1138
        %1175 = vmatprep.subr.mxu0 0.0
        %1176 = vmatpush2.msra.mxu0 0.0
        %1177 = vmatprep.subr.mxu0 0.0
        %1178 = vmatpush2.msra.mxu0 0.0
        %1179 = vmatprep.subr.mxu0 0.0
        %1180 = vmatpush2.msra.mxu0 0.0
        %1181 = vmatprep.subr.mxu0 0.0
        %1182 = vmatpush2.msra.mxu0 0.0
        %1183 = vmatprep.subr.mxu0 0.0
        %1184 = vmatpush2.msra.mxu0 0.0
        %1185 = vmatprep.subr.mxu0 0.0
        %1186 = vmatpush2.msra.mxu0 0.0
        %1187 = vmatprep.subr.mxu0 0.0
        %1188 = vmatpush2.msra.mxu0 0.0
        %1189 = vmatprep.subr.mxu0 0.0
        %1190 = vmatpush2.msra.mxu0 0.0
        %1191 = vmatprep.subr.mxu0 0.0
        %1192 = vmatpush2.msra.mxu0 0.0
        %1193 = vmatprep.subr.mxu0 0.0
        %1194 = vmatpush2.msra.mxu0 0.0
        %1195 = vmatprep.subr.mxu0 0.0
        %1196 = vmatpush2.msra.mxu0 0.0
        %1197 = vmatprep.subr.mxu0 0.0
        %1198 = vmatpush2.msra.mxu0 0.0
        %1199 = vmatprep.subr.mxu0 0.0
        %1200 = vmatpush2.msra.mxu0 0.0
        %1201 = vmatprep.subr.mxu0 0.0
        %1202 = vmatpush2.msra.mxu0 0.0
        %1203 = vmatprep.subr.mxu0 0.0
        %1204 = vmatpush2.msra.mxu0 0.0
        %1205 = vmatprep.subr.mxu0 0.0
        %1206 = vmatpush2.msra.mxu0 0.0
        %1207 = vmatprep.mubr.f32.mxu0 0.0
        %1208 = vmatmul.mubr.f32.gmra.mxu0 %v1141
        %v1209 = vpop.f32.mrf.mxu0
        %v1210 = vadd.f32 0.0, %v1209
        %v1211 = vpop.f32.mrf.mxu0
        %1212 = vdwg.mxu0
        %v1213 = vsel %vm633, %v1210, -inf
        %1214 = vmax.xlane.f32.xlu0 %v1213
        %v1215 = vpop.xlane.xlu0 %1214
        %v1216 = vmax.f32 %v1215, -1e+30
        %v1217 = vsub.f32 -1e+30, %v1216
        %v1218 = vmul.f32 %v1217, 1.442695
        %v1219 = vpow.pop %v1218
        %v1220 = vsub.f32 %v1210, %v1216
        %v1221 = vmul.f32 %v1220, 1.442695
        %v1222 = vpow.pop %v1221
        %v1223 = vmul.f32 %v1219, 0.0
        %v1224 = vsel %vm633, %v1222, 0.0
        %1225 = vadd.xlane.f32.xlu0 %v1224
        %v1226 = vpop.xlane.xlu0 %1225
        %v1227 = vadd.f32 %v1223, %v1226
        %s1228 = scalar_lea.vmem [#allocation3], 24
        %v1229 = vld [vmem:[%s1228] sm:$0xff]
        %v1231 = vsel %vm633, %v1222, 0
        %1233 = vmatprep.subr.mxu0 0.0
        %1234 = vmatpush1.msra.mxu0 0.0
        %1235 = vmatprep.subr.mxu0 0.0
        %1236 = vmatpush1.msra.mxu0 0.0
        %1237 = vmatprep.subr.mxu0 0.0
        %1238 = vmatpush1.msra.mxu0 0.0
        %1239 = vmatprep.subr.mxu0 0.0
        %1240 = vmatpush1.msra.mxu0 0.0
        %1241 = vmatprep.subr.mxu0 0.0
        %1242 = vmatpush1.msra.mxu0 0.0
        %1243 = vmatprep.subr.mxu0 0.0
        %1244 = vmatpush1.msra.mxu0 0.0
        %1245 = vmatprep.subr.mxu0 0.0
        %1246 = vmatpush1.msra.mxu0 0.0
        %1247 = vmatprep.subr.mxu0 0.0
        %1248 = vmatpush1.msra.mxu0 0.0
        %1249 = vmatprep.subr.mxu0 0.0
        %1250 = vmatpush1.msra.mxu0 0.0
        %1251 = vmatprep.subr.mxu0 0.0
        %1252 = vmatpush1.msra.mxu0 0.0
        %1253 = vmatprep.subr.mxu0 0.0
        %1254 = vmatpush1.msra.mxu0 0.0
        %1255 = vmatprep.subr.mxu0 0.0
        %1256 = vmatpush1.msra.mxu0 0.0
        %1257 = vmatprep.subr.mxu0 0.0
        %1258 = vmatpush1.msra.mxu0 0.0
        %1259 = vmatprep.subr.mxu0 0.0
        %1260 = vmatpush1.msra.mxu0 0.0
        %1261 = vmatprep.subr.mxu0 0.0
        %1262 = vmatpush1.msra.mxu0 0.0
        %1263 = vmatprep.subr.mxu0 0.0
        %1264 = vmatpush1.msra.mxu0 %v1229
        %1265 = vmatprep.subr.mxu0 0.0
        %1266 = vmatpush2.msra.mxu0 0.0
        %1267 = vmatprep.subr.mxu0 0.0
        %1268 = vmatpush2.msra.mxu0 0.0
        %1269 = vmatprep.subr.mxu0 0.0
        %1270 = vmatpush2.msra.mxu0 0.0
        %1271 = vmatprep.subr.mxu0 0.0
        %1272 = vmatpush2.msra.mxu0 0.0
        %1273 = vmatprep.subr.mxu0 0.0
        %1274 = vmatpush2.msra.mxu0 0.0
        %1275 = vmatprep.subr.mxu0 0.0
        %1276 = vmatpush2.msra.mxu0 0.0
        %1277 = vmatprep.subr.mxu0 0.0
        %1278 = vmatpush2.msra.mxu0 0.0
        %1279 = vmatprep.subr.mxu0 0.0
        %1280 = vmatpush2.msra.mxu0 0.0
        %1281 = vmatprep.subr.mxu0 0.0
        %1282 = vmatpush2.msra.mxu0 0.0
        %1283 = vmatprep.subr.mxu0 0.0
        %1284 = vmatpush2.msra.mxu0 0.0
        %1285 = vmatprep.subr.mxu0 0.0
        %1286 = vmatpush2.msra.mxu0 0.0
        %1287 = vmatprep.subr.mxu0 0.0
        %1288 = vmatpush2.msra.mxu0 0.0
        %1289 = vmatprep.subr.mxu0 0.0
        %1290 = vmatpush2.msra.mxu0 0.0
        %1291 = vmatprep.subr.mxu0 0.0
        %1292 = vmatpush2.msra.mxu0 0.0
        %1293 = vmatprep.subr.mxu0 0.0
        %1294 = vmatpush2.msra.mxu0 0.0
        %1295 = vmatprep.subr.mxu0 0.0
        %1296 = vmatpush2.msra.mxu0 0.0
        %1297 = vmatprep.mubr.f32.mxu0 0.0
        %1298 = vmatmul.mubr.f32.gmra.mxu0 %v1231
        %v1299 = vpop.f32.mrf.mxu0
        %v1300 = vadd.f32 0.0, %v1299
        %v1301 = vpop.f32.mrf.mxu0
        %1302 = vdwg.mxu0
        %v1303 = vadd.f32 %v1223, %v1300
        %v1304 = vrcp.pop %v1227
        %v1305 = vmul.f32 %v1303, %v1304
        %1307 = vrot.lane.b32.xlu0 %v967, 8
        %v1308 = vpop.permute.xlu0 %1307
        %1311 = vrot.lane.b32.xlu0 %v1136, 16
        %v1312 = vpop.permute.xlu0 %1311
        %1315 = vrot.lane.b32.xlu0 %v1305, 24
        %v1316 = vpop.permute.xlu0 %1315
        %v1318 = vsel %vm633, %v798, %v1308
        %vm1319 = vcmask 130048
        %v1320 = vsel %vm1319, %v1318, %v1312
        %vm1321 = vcmask 195584
        %v1322 = vsel %vm1321, %v1320, %v1316
        %v1323 = vld [vmem:[#allocation7] sm:$0xff]
        %v1324 = vld [vmem:[#allocation7 + $0x8] sm:$0xff]
        %v1325 = vld [vmem:[#allocation7 + $0x10] sm:$0xff]
        %v1326 = vld [vmem:[#allocation7 + $0x18] sm:$0xff]
        %v1327 = vld [vmem:[%s6] sm:$0x1]
        %v1329 = vlaneseq
        %v1330 = vshrl.u32 %v1329, 7
        %v1331 = vsub.s32 0, %v1330
        %v1332 = vrot.slane %v1327, %v1331
        %v1335 = vsel %vm558, %v1322, 0
        %1337 = vmatprep.subr.mxu0 0.0
        %1338 = vmatpush1.msra.mxu0 0.0
        %1339 = vmatprep.subr.mxu0 0.0
        %1340 = vmatpush1.msra.mxu0 0.0
        %1341 = vmatprep.subr.mxu0 0.0
        %1342 = vmatpush1.msra.mxu0 0.0
        %1343 = vmatprep.subr.mxu0 0.0
        %1344 = vmatpush1.msra.mxu0 0.0
        %1345 = vmatprep.subr.mxu0 0.0
        %1346 = vmatpush1.msra.mxu0 0.0
        %1347 = vmatprep.subr.mxu0 0.0
        %1348 = vmatpush1.msra.mxu0 0.0
        %1349 = vmatprep.subr.mxu0 0.0
        %1350 = vmatpush1.msra.mxu0 0.0
        %1351 = vmatprep.subr.mxu0 0.0
        %1352 = vmatpush1.msra.mxu0 0.0
        %1353 = vmatprep.subr.mxu0 0.0
        %1354 = vmatpush1.msra.mxu0 0.0
        %1355 = vmatprep.subr.mxu0 0.0
        %1356 = vmatpush1.msra.mxu0 0.0
        %1357 = vmatprep.subr.mxu0 0.0
        %1358 = vmatpush1.msra.mxu0 0.0
        %1359 = vmatprep.subr.mxu0 0.0
        %1360 = vmatpush1.msra.mxu0 0.0
        %1361 = vmatprep.subr.mxu0 0.0
        %1362 = vmatpush1.msra.mxu0 %v1326
        %1363 = vmatprep.subr.mxu0 0.0
        %1364 = vmatpush1.msra.mxu0 %v1325
        %1365 = vmatprep.subr.mxu0 0.0
        %1366 = vmatpush1.msra.mxu0 %v1324
        %1367 = vmatprep.subr.mxu0 0.0
        %1368 = vmatpush1.msra.mxu0 %v1323
        %1369 = vmatprep.subr.mxu0 0.0
        %1370 = vmatpush2.msra.mxu0 0.0
        %1371 = vmatprep.subr.mxu0 0.0
        %1372 = vmatpush2.msra.mxu0 0.0
        %1373 = vmatprep.subr.mxu0 0.0
        %1374 = vmatpush2.msra.mxu0 0.0
        %1375 = vmatprep.subr.mxu0 0.0
        %1376 = vmatpush2.msra.mxu0 0.0
        %1377 = vmatprep.subr.mxu0 0.0
        %1378 = vmatpush2.msra.mxu0 0.0
        %1379 = vmatprep.subr.mxu0 0.0
        %1380 = vmatpush2.msra.mxu0 0.0
        %1381 = vmatprep.subr.mxu0 0.0
        %1382 = vmatpush2.msra.mxu0 0.0
        %1383 = vmatprep.subr.mxu0 0.0
        %1384 = vmatpush2.msra.mxu0 0.0
        %1385 = vmatprep.subr.mxu0 0.0
        %1386 = vmatpush2.msra.mxu0 0.0
        %1387 = vmatprep.subr.mxu0 0.0
        %1388 = vmatpush2.msra.mxu0 0.0
        %1389 = vmatprep.subr.mxu0 0.0
        %1390 = vmatpush2.msra.mxu0 0.0
        %1391 = vmatprep.subr.mxu0 0.0
        %1392 = vmatpush2.msra.mxu0 0.0
        %1393 = vmatprep.subr.mxu0 0.0
        %1394 = vmatpush2.msra.mxu0 0.0
        %1395 = vmatprep.subr.mxu0 0.0
        %1396 = vmatpush2.msra.mxu0 0.0
        %1397 = vmatprep.subr.mxu0 0.0
        %1398 = vmatpush2.msra.mxu0 0.0
        %1399 = vmatprep.subr.mxu0 0.0
        %1400 = vmatpush2.msra.mxu0 0.0
        %1401 = vmatprep.mubr.f32.mxu0 0.0
        %1402 = vmatmul.mubr.f32.gmra.mxu0 %v1335
        %v1403 = vpop.f32.mrf.mxu0
        %v1404 = vadd.f32 %v1332, %v1403
        %v1405 = vpop.f32.mrf.mxu0
        %1406 = vdwg.mxu0
        %1407 = vst.msk [vmem:[%s328] sm:$0xff] %vm558, %v1404
        %s1408 = sand.u32 %s202, 1
        %s1409 = scalar_lea.sflag [#allocation6], %s1408
        %s1410 = sand.u32 %s202, 1
        %s1411 = smul.addr %s1410, 8
        %s1412 = scalar_lea.vmem [#allocation9], %s1411
        // Predicated region
        $region61: #{tpu_custom_call.1} parent=47 // pred_check
          %p1413 = pneg %p212
        $region62: #{tpu_custom_call.1} parent=47 // pred_check_branch
          %1415 = sbr.rel (%p1413) target = $region64
        $region63: #{tpu_custom_call.1} parent=47 // pred_region
          %s1417 = ssub.s32 128, 128
          %1418 = vsyncadd %s1409, %s1417
          %s1419 = sadd.s32 %s28, %s27
          %s1420 = smul.addr %s1419, 128
          %s1421 = scalar_lea.hbm %s7, %s1420
          %s1423 = sshll.u32 %s1412, 4
          %s1424 = int_to_ptr.vmem [resolvable:$true] %s1423
          %1426 = dma.vmem_to_hbm [thread:$0]  %s1424, 128, %s1421, %s1409
        $region64: #{tpu_custom_call.1} parent=47 // pred_fallthru
          _
      $region48: #{tpu_custom_call.1} parent=5 // pred_fallthru
        _
      %p1427 = scmp.le.s32.totalorder 2, %s18
      // Predicated region
      $region65: #{tpu_custom_call.1} parent=5 // pred_check
        %p1428 = pneg %p1427
      $region66: #{tpu_custom_call.1} parent=5 // pred_check_branch
        %1430 = sbr.rel (%p1428) target = $region68
      $region67: #{tpu_custom_call.1} parent=5 // pred_region
        %s1431 = ssub.s32 %s18, 2
        // Predicated region
        $region69: #{tpu_custom_call.1} parent=67 // pred_check
          %p1432 = pneg %p218
        $region70: #{tpu_custom_call.1} parent=67 // pred_check_branch
          %1434 = sbr.rel (%p1432) target = $region72
        $region71: #{tpu_custom_call.1} parent=67 // pred_region
          %s1435 = sand.u32 %s203, 1
          %s1436 = scalar_lea.sflag [#allocation6], %s1435
          %s1437 = sand.u32 %s203, 1
          %s1438 = smul.addr %s1437, 8
          %s1439 = scalar_lea.vmem [#allocation9], %s1438
          %1440 = dma.done %s1436, 128
        $region72: #{tpu_custom_call.1} parent=67 // pred_fallthru
          _
      $region68: #{tpu_custom_call.1} parent=5 // pred_fallthru
        _
    $region6: #{tpu_custom_call.1} parent=1 // loop_footer
      %s22 = sadd.s32 1, %s18
    $region7: #{tpu_custom_call.1} parent=1 // loop_footer_branch
      %17 = sbr.rel target = $region3
    $region8: #{tpu_custom_call.1} parent=1 // loop_exit
      _
    %1441 = vsyncpa [#allocation5], 1
    %s1442 = scalar_lea.sflag [#allocation5], 1
    %1443 = vsyncpa %s1442, 1
    %1444 = vsyncpa [#allocation8], 1
    %1445 = vsyncpa [#allocation6], 1
    %s1446 = scalar_lea.sflag [#allocation6], 1
    %1447 = vsyncpa %s1446, 1

</llo_original>
